<compile_context>
chip_gen: v5e
topology: v5e:2x2
jax: 0.10.0
libtpu: 0.0.40
codegen_flags: <defaults>
</compile_context>

<pallas_src>
import functools

import jax
import jax.numpy as jnp
from jax.experimental import pallas as pl
from jax.experimental.pallas import tpu as pltpu


# ------------------------------- helpers ------------------------------------


def _round_up(x, m):
    return (x + m - 1) // m * m


_VMEM_LIMIT = 48 * 1024 * 1024  # safe under v7x's 64 MiB physical VMEM


# ----------------------------- Pallas kernel --------------------------------


def _clip_layer_kernel(x_ref, ln1g_ref, ln1b_ref, wqkv_ref, bqkv_ref,
                       wo_ref, bo_ref, ln2g_ref, ln2b_ref,
                       w1_ref, b1_ref, w2_ref, b2_ref,
                       o_ref, ctx_ref, *,
                       num_heads, head_dim, eps, compute_dtype):
    """One full transformer layer for one batch element.

    x_ref: (1, S, D); weights in compute_dtype (bf16); biases / LN params in
    f32 as (1, ...). Softmax 1/sqrt(Dh) scale is pre-folded into the Q slice
    of wqkv / bqkv. ctx_ref: (S, D) f32 VMEM scratch for per-head contexts.
    """
    x = x_ref[0].astype(jnp.float32)                         # (S, D)
    S, D = x.shape

    # --- pre-LN 1 (f32) ---
    mu = jnp.mean(x, axis=-1, keepdims=True)
    var = jnp.mean(jnp.square(x - mu), axis=-1, keepdims=True)
    h = (x - mu) * jax.lax.rsqrt(var + eps) * ln1g_ref[...] + ln1b_ref[...]

    # --- fused QKV projection (bf16 MXU inputs, f32 accumulation) ---
    qkv = jnp.dot(h.astype(compute_dtype), wqkv_ref[...],
                  preferred_element_type=jnp.float32) + bqkv_ref[...]  # (S, 3D)

    # causal mask (>=2D iota required on TPU)
    row = jax.lax.broadcasted_iota(jnp.int32, (S, S), 0)
    col = jax.lax.broadcasted_iota(jnp.int32, (S, S), 1)
    causal = col <= row
    neg = jnp.float32(-1e9)

    # per-head causal attention; contexts land in VMEM scratch so the output
    # projection becomes a single full-K (S, D) x (D, D) MXU matmul.
    for hh in range(num_heads):
        lo = hh * head_dim
        q = qkv[:, lo:lo + head_dim].astype(compute_dtype)             # (S, Dh)
        k = qkv[:, D + lo:D + lo + head_dim].astype(compute_dtype)     # (S, Dh)
        v = qkv[:, 2 * D + lo:2 * D + lo + head_dim].astype(compute_dtype)

        s = jax.lax.dot_general(q, k, (((1,), (1,)), ((), ())),
                                preferred_element_type=jnp.float32)    # (S, S)
        s = jnp.where(causal, s, neg)
        s = s - jnp.max(s, axis=-1, keepdims=True)
        p = jnp.exp(s)
        p = p * pl.reciprocal(jnp.sum(p, axis=-1, keepdims=True), approx=True)

        ctx_ref[:, lo:lo + head_dim] = jnp.dot(
            p.astype(compute_dtype), v, preferred_element_type=jnp.float32)

    attn = x + bo_ref[...] + jnp.dot(
        ctx_ref[...].astype(compute_dtype), wo_ref[...],
        preferred_element_type=jnp.float32)                             # (S, D)

    # --- pre-LN 2 + MLP (quick-GELU) + residual ---
    mu2 = jnp.mean(attn, axis=-1, keepdims=True)
    var2 = jnp.mean(jnp.square(attn - mu2), axis=-1, keepdims=True)
    h2 = (attn - mu2) * jax.lax.rsqrt(var2 + eps) * ln2g_ref[...] + ln2b_ref[...]

    m = jnp.dot(h2.astype(compute_dtype), w1_ref[...],
                preferred_element_type=jnp.float32) + b1_ref[...]        # (S, 4D)
    m = m * jax.nn.sigmoid(1.702 * m)                       # quick-GELU in f32

    y = jnp.dot(m.astype(compute_dtype), w2_ref[...],
                preferred_element_type=jnp.float32) + b2_ref[...]        # (S, D)
    o_ref[0] = (attn + y).astype(o_ref.dtype)


# ----------------------------- kernel wrapper --------------------------------


def clip_layer(x, p, *, num_heads, eps=1e-5):
    """x: (B, S, D) f32 -> (B, S, D) f32. One fused transformer layer."""
    B, S, D = x.shape
    Dff = p["w1"].shape[1]
    head_dim = D // num_heads
    kernel = functools.partial(
        _clip_layer_kernel, num_heads=num_heads, head_dim=head_dim,
        eps=eps, compute_dtype=p["wqkv"].dtype)
    rep = lambda b: (0, 0)          # weights / params: same block every step
    return pl.pallas_call(
        kernel,
        out_shape=jax.ShapeDtypeStruct((B, S, D), x.dtype),
        grid=(B,),
        in_specs=[
            pl.BlockSpec((1, S, D), lambda b: (b, 0, 0)),   # x
            pl.BlockSpec((1, D), rep),                      # ln1 gamma
            pl.BlockSpec((1, D), rep),                      # ln1 beta
            pl.BlockSpec((D, 3 * D), rep),                  # wqkv (scale folded)
            pl.BlockSpec((1, 3 * D), rep),                  # bqkv
            pl.BlockSpec((D, D), rep),                      # wo
            pl.BlockSpec((1, D), rep),                      # bo
            pl.BlockSpec((1, D), rep),                      # ln2 gamma
            pl.BlockSpec((1, D), rep),                      # ln2 beta
            pl.BlockSpec((D, Dff), rep),                    # w1
            pl.BlockSpec((1, Dff), rep),                    # b1
            pl.BlockSpec((Dff, D), rep),                    # w2
            pl.BlockSpec((1, D), rep),                      # b2
        ],
        out_specs=pl.BlockSpec((1, S, D), lambda b: (b, 0, 0)),
        scratch_shapes=[pltpu.VMEM((S, D), jnp.float32)],   # head contexts
        compiler_params=pltpu.CompilerParams(
            dimension_semantics=("parallel",),
            vmem_limit_bytes=_VMEM_LIMIT,
        ),
    )(x,
      p["ln1_g"].reshape(1, D), p["ln1_b"].reshape(1, D),
      p["wqkv"], p["bqkv"].reshape(1, 3 * D),
      p["wo"], p["bo"].reshape(1, D),
      p["ln2_g"].reshape(1, D), p["ln2_b"].reshape(1, D),
      p["w1"], p["b1"].reshape(1, Dff),
      p["w2"], p["b2"].reshape(1, D))


# ------------------------------ model wrapper --------------------------------


class CLIPEmbedder:
    """JAX/Pallas re-implementation of CLIPEmbedder forward (layer=RAW_HIDDEN)."""

    RAW_HIDDEN = "raw_hidden"

    def __init__(
        self,
        vocab_size=100,
        max_seq_len=8,
        output_size=32,
        num_heads=4,
        num_layers=2,
        layer=RAW_HIDDEN,
        layer_idx=None,
        return_pooled=False,
        seed=0,
    ):
        assert output_size % num_heads == 0
        self.vocab_size = vocab_size
        self.max_length = max_seq_len
        self.output_size = output_size
        self.num_heads = num_heads
        self.head_dim = output_size // num_heads
        self.num_layers = num_layers
        self.layer = layer
        self.layer_idx = num_layers - 1 if layer_idx is None else layer_idx
        self.return_pooled = return_pooled
        self.cache_hidden_state = None  # Callback replacement

        key = jax.random.PRNGKey(seed)
        D = output_size
        compute_dtype = jnp.bfloat16           # MXU inputs; f32 accumulation
        scale = 1.0 / float(self.head_dim) ** 0.5

        def nrm(k, shape, std=0.02):
            return (jax.random.normal(k, shape, jnp.float32) * std).astype(
                jnp.float32
            )

        keys = jax.random.split(key, 2 + num_layers)
        self.tok_emb = nrm(keys[0], (vocab_size, D))
        self.pos_emb = nrm(keys[1], (max_seq_len, D))

        self.layers = []
        for li in range(num_layers):
            lk = jax.random.split(keys[2 + li], 8)
            wq, wk, wv = nrm(lk[0], (D, D)), nrm(lk[1], (D, D)), nrm(lk[2], (D, D))
            bq = jnp.zeros((D,), jnp.float32)
            bk = jnp.zeros((D,), jnp.float32)
            bv = jnp.zeros((D,), jnp.float32)
            # fold softmax 1/sqrt(Dh) scale into the Q projection (zero runtime
            # cost), and concat into a single fused (D, 3D) QKV weight.
            wqkv = jnp.concatenate([wq * scale, wk, wv], axis=1)
            bqkv = jnp.concatenate([bq * scale, bk, bv], axis=0)
            p = dict(
                ln1_g=jnp.ones((D,), jnp.float32),
                ln1_b=jnp.zeros((D,), jnp.float32),
                wqkv=wqkv.astype(compute_dtype),
                bqkv=bqkv,
                wo=nrm(lk[3], (D, D)).astype(compute_dtype),
                bo=jnp.zeros((D,), jnp.float32),
                ln2_g=jnp.ones((D,), jnp.float32),
                ln2_b=jnp.zeros((D,), jnp.float32),
                w1=nrm(lk[4], (D, 4 * D)).astype(compute_dtype),
                b1=jnp.zeros((4 * D,), jnp.float32),
                w2=nrm(lk[5], (4 * D, D)).astype(compute_dtype),
                b2=jnp.zeros((D,), jnp.float32),
            )
            self.layers.append(p)
        # final-LN ("neck") params exist in the model but are NOT applied for
        # layer=RAW_HIDDEN (matches the PyTorch forward).
        self.neck_g = jnp.ones((D,), jnp.float32)
        self.neck_b = jnp.zeros((D,), jnp.float32)

    # --- backbone: embeddings + transformer blocks, with callback caching ---
    def _backbone(self, text_ids):
        B, S = text_ids.shape
        D = self.output_size
        # TODO(synk): embedding gather is plain-JAX glue (no matmul hot path).
        x = jnp.take(self.tok_emb, text_ids, axis=0) + self.pos_emb[None, :S, :]
        x = x.astype(jnp.float32)

        # pad sequence once to a multiple of 8 (sublane); the causal mask makes
        # padded key positions inert for real queries, padded rows are dropped.
        S_pad = _round_up(S, 8)
        if S_pad != S:
            x = jnp.pad(x, ((0, 0), (0, S_pad - S), (0, 0)))

        # layers after layer_idx are dead compute for the RAW_HIDDEN /
        # return_pooled=False path -> skip them.
        last = min(self.layer_idx, self.num_layers - 1)
        for i in range(last + 1):
            x = clip_layer(x, self.layers[i], num_heads=self.num_heads)
            # callback_fn(i, h): cache hidden state at layer_idx
            if i == self.layer_idx:
                self.cache_hidden_state = x[:, :S, :]
        return x[:, :S, :]

    def __call__(self, text_ids):
        x = self._backbone(text_ids)
        if self.layer == self.RAW_HIDDEN:
            z = self.cache_hidden_state
        else:
            raise ValueError(f"do not support layer={self.layer}")
        # return_pooled=False path
        del x
        return z


# --------------------------------- main --------------------------------------

if __name__ == "__main__":
    B, S = 2, 8
    embedder = CLIPEmbedder(
        vocab_size=100,
        max_seq_len=S,
        output_size=32,
        num_heads=4,
        num_layers=2,
        layer=CLIPEmbedder.RAW_HIDDEN,
        layer_idx=None,
        return_pooled=False,
        seed=0,
    )
    key = jax.random.PRNGKey(0)
    text_ids = jax.random.randint(key, (B, S), 0, embedder.vocab_size, jnp.int32)

    z = embedder(text_ids)
    z = jax.block_until_ready(z)
    assert z.shape == (B, S, embedder.output_size), z.shape
    assert z.dtype == jnp.float32
    assert bool(jnp.all(jnp.isfinite(z)))
    print("KERNEL_OK")
</pallas_src>

<mosaic_0001>
module attributes {stable_mosaic.version = 11 : i64} {
  func.func @_clip_layer_kernel(%arg0: i32, %arg1: memref<1x8x32xf32, #tpu.memory_space<vmem>>, %arg2: memref<1x32xf32, #tpu.memory_space<vmem>>, %arg3: memref<1x32xf32, #tpu.memory_space<vmem>>, %arg4: memref<32x96xbf16, #tpu.memory_space<vmem>>, %arg5: memref<1x96xf32, #tpu.memory_space<vmem>>, %arg6: memref<32x32xbf16, #tpu.memory_space<vmem>>, %arg7: memref<1x32xf32, #tpu.memory_space<vmem>>, %arg8: memref<1x32xf32, #tpu.memory_space<vmem>>, %arg9: memref<1x32xf32, #tpu.memory_space<vmem>>, %arg10: memref<32x128xbf16, #tpu.memory_space<vmem>>, %arg11: memref<1x128xf32, #tpu.memory_space<vmem>>, %arg12: memref<128x32xbf16, #tpu.memory_space<vmem>>, %arg13: memref<1x32xf32, #tpu.memory_space<vmem>>, %arg14: memref<1x8x32xf32, #tpu.memory_space<vmem>>, %arg15: memref<8x32xf32, #tpu.memory_space<vmem>>) attributes {dimension_semantics = [#tpu.dimension_semantics<parallel>], iteration_bounds = array<i64: 2>, scalar_prefetch = 0 : i64, scratch_operands = 1 : i64, tpu.core_type = #tpu.core_type<tc>, window_params = [{transform_indices = @transform_0, window_bounds = array<i64: 1, 8, 32>}, {pipeline_mode = #tpu.pipeline_mode<synchronous>, transform_indices = @transform_1, window_bounds = array<i64: 1, 32>}, {pipeline_mode = #tpu.pipeline_mode<synchronous>, transform_indices = @transform_2, window_bounds = array<i64: 1, 32>}, {pipeline_mode = #tpu.pipeline_mode<synchronous>, transform_indices = @transform_3, window_bounds = array<i64: 32, 96>}, {pipeline_mode = #tpu.pipeline_mode<synchronous>, transform_indices = @transform_4, window_bounds = array<i64: 1, 96>}, {pipeline_mode = #tpu.pipeline_mode<synchronous>, transform_indices = @transform_5, window_bounds = array<i64: 32, 32>}, {pipeline_mode = #tpu.pipeline_mode<synchronous>, transform_indices = @transform_6, window_bounds = array<i64: 1, 32>}, {pipeline_mode = #tpu.pipeline_mode<synchronous>, transform_indices = @transform_7, window_bounds = array<i64: 1, 32>}, {pipeline_mode = #tpu.pipeline_mode<synchronous>, transform_indices = @transform_8, window_bounds = array<i64: 1, 32>}, {pipeline_mode = #tpu.pipeline_mode<synchronous>, transform_indices = @transform_9, window_bounds = array<i64: 32, 128>}, {pipeline_mode = #tpu.pipeline_mode<synchronous>, transform_indices = @transform_10, window_bounds = array<i64: 1, 128>}, {pipeline_mode = #tpu.pipeline_mode<synchronous>, transform_indices = @transform_11, window_bounds = array<i64: 128, 32>}, {pipeline_mode = #tpu.pipeline_mode<synchronous>, transform_indices = @transform_12, window_bounds = array<i64: 1, 32>}, {transform_indices = @transform_13, window_bounds = array<i64: 1, 8, 32>}]} {
    %c0 = arith.constant 0 : index
    %c0_0 = arith.constant 0 : index
    %c0_1 = arith.constant 0 : index
    %0 = vector.load %arg1[%c0, %c0_0, %c0_1] : memref<1x8x32xf32, #tpu.memory_space<vmem>>, vector<1x8x32xf32>
    %1 = vector.shape_cast %0 : vector<1x8x32xf32> to vector<8x32xf32>
    %cst = arith.constant dense<0.000000e+00> : vector<8xf32>
    %2 = vector.multi_reduction <add>, %1, %cst [1] : vector<8x32xf32> to vector<8xf32>
    %3 = vector.shape_cast %2 : vector<8xf32> to vector<8x1xf32>
    %cst_2 = arith.constant 3.200000e+01 : f32
    %4 = vector.broadcast %cst_2 : f32 to vector<8x1xf32>
    %5 = arith.divf %3, %4 : vector<8x1xf32>
    %6 = vector.broadcast %5 : vector<8x1xf32> to vector<8x32xf32>
    %7 = arith.subf %1, %6 : vector<8x32xf32>
    %8 = arith.mulf %7, %7 : vector<8x32xf32>
    %cst_3 = arith.constant dense<0.000000e+00> : vector<8xf32>
    %9 = vector.multi_reduction <add>, %8, %cst_3 [1] : vector<8x32xf32> to vector<8xf32>
    %10 = vector.shape_cast %9 : vector<8xf32> to vector<8x1xf32>
    %cst_4 = arith.constant 3.200000e+01 : f32
    %11 = vector.broadcast %cst_4 : f32 to vector<8x1xf32>
    %12 = arith.divf %10, %11 : vector<8x1xf32>
    %13 = vector.broadcast %5 : vector<8x1xf32> to vector<8x32xf32>
    %14 = arith.subf %1, %13 : vector<8x32xf32>
    %cst_5 = arith.constant 9.99999974E-6 : f32
    %15 = vector.broadcast %cst_5 : f32 to vector<8x1xf32>
    %16 = arith.addf %12, %15 : vector<8x1xf32>
    %17 = math.rsqrt %16 : vector<8x1xf32>
    %18 = vector.broadcast %17 : vector<8x1xf32> to vector<8x32xf32>
    %19 = arith.mulf %14, %18 : vector<8x32xf32>
    %c0_6 = arith.constant 0 : index
    %c0_7 = arith.constant 0 : index
    %20 = vector.load %arg2[%c0_6, %c0_7] : memref<1x32xf32, #tpu.memory_space<vmem>>, vector<1x32xf32>
    %21 = vector.broadcast %20 : vector<1x32xf32> to vector<8x32xf32>
    %22 = arith.mulf %19, %21 : vector<8x32xf32>
    %c0_8 = arith.constant 0 : index
    %c0_9 = arith.constant 0 : index
    %23 = vector.load %arg3[%c0_8, %c0_9] : memref<1x32xf32, #tpu.memory_space<vmem>>, vector<1x32xf32>
    %24 = vector.broadcast %23 : vector<1x32xf32> to vector<8x32xf32>
    %25 = arith.addf %22, %24 : vector<8x32xf32>
    %26 = arith.truncf %25 : vector<8x32xf32> to vector<8x32xbf16>
    %c0_10 = arith.constant 0 : index
    %c0_11 = arith.constant 0 : index
    %27 = vector.load %arg4[%c0_10, %c0_11] : memref<32x96xbf16, #tpu.memory_space<vmem>>, vector<32x96xbf16>
    %cst_12 = arith.constant dense<0.000000e+00> : vector<8x96xf32>
    %28 = tpu.matmul %26, %27, %cst_12 {dimension_numbers = #tpu.dot_dimension_numbers<[1], [0], [0], [1], [0, 0, 1, 1], [], []>} : vector<8x32xbf16>, vector<32x96xbf16>, vector<8x96xf32> -> vector<8x96xf32>
    %c0_13 = arith.constant 0 : index
    %c0_14 = arith.constant 0 : index
    %29 = vector.load %arg5[%c0_13, %c0_14] : memref<1x96xf32, #tpu.memory_space<vmem>>, vector<1x96xf32>
    %30 = vector.broadcast %29 : vector<1x96xf32> to vector<8x96xf32>
    %31 = arith.addf %28, %30 : vector<8x96xf32>
    %32 = tpu.iota {dimensions = array<i32: 0>} : vector<8x8xi32>
    %33 = tpu.iota {dimensions = array<i32: 1>} : vector<8x8xi32>
    %34 = arith.cmpi sle, %33, %32 : vector<8x8xi32>
    %35 = vector.extract_strided_slice %31 {offsets = [0, 0], sizes = [8, 8], strides = [1, 1]} : vector<8x96xf32> to vector<8x8xf32>
    %36 = arith.truncf %35 : vector<8x8xf32> to vector<8x8xbf16>
    %37 = vector.extract_strided_slice %31 {offsets = [0, 32], sizes = [8, 8], strides = [1, 1]} : vector<8x96xf32> to vector<8x8xf32>
    %38 = arith.truncf %37 : vector<8x8xf32> to vector<8x8xbf16>
    %39 = vector.extract_strided_slice %31 {offsets = [0, 64], sizes = [8, 8], strides = [1, 1]} : vector<8x96xf32> to vector<8x8xf32>
    %40 = arith.truncf %39 : vector<8x8xf32> to vector<8x8xbf16>
    %cst_15 = arith.constant dense<0.000000e+00> : vector<8x8xf32>
    %41 = tpu.matmul %36, %38, %cst_15 {dimension_numbers = #tpu.dot_dimension_numbers<[1], [1], [0], [0], [0, 0, 1, 0], [], []>} : vector<8x8xbf16>, vector<8x8xbf16>, vector<8x8xf32> -> vector<8x8xf32>
    %cst_16 = arith.constant -1.000000e+09 : f32
    %42 = vector.broadcast %cst_16 : f32 to vector<8x8xf32>
    %43 = arith.select %34, %41, %42 : vector<8x8xi1>, vector<8x8xf32>
    %cst_17 = arith.constant dense<0xFF800000> : vector<8xf32>
    %44 = vector.multi_reduction <maximumf>, %43, %cst_17 [1] : vector<8x8xf32> to vector<8xf32>
    %45 = vector.shape_cast %44 : vector<8xf32> to vector<8x1xf32>
    %46 = vector.broadcast %45 : vector<8x1xf32> to vector<8x8xf32>
    %47 = arith.subf %43, %46 : vector<8x8xf32>
    %48 = math.exp %47 : vector<8x8xf32>
    %cst_18 = arith.constant dense<0.000000e+00> : vector<8xf32>
    %49 = vector.multi_reduction <add>, %48, %cst_18 [1] : vector<8x8xf32> to vector<8xf32>
    %50 = vector.shape_cast %49 : vector<8xf32> to vector<8x1xf32>
    %51 = tpu.reciprocal %50 {approx = true} : vector<8x1xf32> -> vector<8x1xf32>
    %52 = vector.broadcast %51 : vector<8x1xf32> to vector<8x8xf32>
    %53 = arith.mulf %48, %52 : vector<8x8xf32>
    %54 = arith.truncf %53 : vector<8x8xf32> to vector<8x8xbf16>
    %cst_19 = arith.constant dense<0.000000e+00> : vector<8x8xf32>
    %55 = tpu.matmul %54, %40, %cst_19 {dimension_numbers = #tpu.dot_dimension_numbers<[1], [0], [0], [1], [0, 0, 1, 1], [], []>} : vector<8x8xbf16>, vector<8x8xbf16>, vector<8x8xf32> -> vector<8x8xf32>
    %c0_20 = arith.constant 0 : index
    %c0_21 = arith.constant 0 : index
    %56 = vector.load %arg15[%c0_20, %c0_21] : memref<8x32xf32, #tpu.memory_space<vmem>>, vector<8x8xf32>
    tpu.vector_store %arg15[%c0_20, %c0_21], %55 {strides = array<i32>} : memref<8x32xf32, #tpu.memory_space<vmem>>, vector<8x8xf32>,
    %57 = vector.extract_strided_slice %31 {offsets = [0, 8], sizes = [8, 8], strides = [1, 1]} : vector<8x96xf32> to vector<8x8xf32>
    %58 = arith.truncf %57 : vector<8x8xf32> to vector<8x8xbf16>
    %59 = vector.extract_strided_slice %31 {offsets = [0, 40], sizes = [8, 8], strides = [1, 1]} : vector<8x96xf32> to vector<8x8xf32>
    %60 = arith.truncf %59 : vector<8x8xf32> to vector<8x8xbf16>
    %61 = vector.extract_strided_slice %31 {offsets = [0, 72], sizes = [8, 8], strides = [1, 1]} : vector<8x96xf32> to vector<8x8xf32>
    %62 = arith.truncf %61 : vector<8x8xf32> to vector<8x8xbf16>
    %cst_22 = arith.constant dense<0.000000e+00> : vector<8x8xf32>
    %63 = tpu.matmul %58, %60, %cst_22 {dimension_numbers = #tpu.dot_dimension_numbers<[1], [1], [0], [0], [0, 0, 1, 0], [], []>} : vector<8x8xbf16>, vector<8x8xbf16>, vector<8x8xf32> -> vector<8x8xf32>
    %cst_23 = arith.constant -1.000000e+09 : f32
    %64 = vector.broadcast %cst_23 : f32 to vector<8x8xf32>
    %65 = arith.select %34, %63, %64 : vector<8x8xi1>, vector<8x8xf32>
    %cst_24 = arith.constant dense<0xFF800000> : vector<8xf32>
    %66 = vector.multi_reduction <maximumf>, %65, %cst_24 [1] : vector<8x8xf32> to vector<8xf32>
    %67 = vector.shape_cast %66 : vector<8xf32> to vector<8x1xf32>
    %68 = vector.broadcast %67 : vector<8x1xf32> to vector<8x8xf32>
    %69 = arith.subf %65, %68 : vector<8x8xf32>
    %70 = math.exp %69 : vector<8x8xf32>
    %cst_25 = arith.constant dense<0.000000e+00> : vector<8xf32>
    %71 = vector.multi_reduction <add>, %70, %cst_25 [1] : vector<8x8xf32> to vector<8xf32>
    %72 = vector.shape_cast %71 : vector<8xf32> to vector<8x1xf32>
    %73 = tpu.reciprocal %72 {approx = true} : vector<8x1xf32> -> vector<8x1xf32>
    %74 = vector.broadcast %73 : vector<8x1xf32> to vector<8x8xf32>
    %75 = arith.mulf %70, %74 : vector<8x8xf32>
    %76 = arith.truncf %75 : vector<8x8xf32> to vector<8x8xbf16>
    %cst_26 = arith.constant dense<0.000000e+00> : vector<8x8xf32>
    %77 = tpu.matmul %76, %62, %cst_26 {dimension_numbers = #tpu.dot_dimension_numbers<[1], [0], [0], [1], [0, 0, 1, 1], [], []>} : vector<8x8xbf16>, vector<8x8xbf16>, vector<8x8xf32> -> vector<8x8xf32>
    %c0_27 = arith.constant 0 : index
    %c8 = arith.constant 8 : index
    %78 = vector.load %arg15[%c0_27, %c8] : memref<8x32xf32, #tpu.memory_space<vmem>>, vector<8x8xf32>
    tpu.vector_store %arg15[%c0_27, %c8], %77 {strides = array<i32>} : memref<8x32xf32, #tpu.memory_space<vmem>>, vector<8x8xf32>,
    %79 = vector.extract_strided_slice %31 {offsets = [0, 16], sizes = [8, 8], strides = [1, 1]} : vector<8x96xf32> to vector<8x8xf32>
    %80 = arith.truncf %79 : vector<8x8xf32> to vector<8x8xbf16>
    %81 = vector.extract_strided_slice %31 {offsets = [0, 48], sizes = [8, 8], strides = [1, 1]} : vector<8x96xf32> to vector<8x8xf32>
    %82 = arith.truncf %81 : vector<8x8xf32> to vector<8x8xbf16>
    %83 = vector.extract_strided_slice %31 {offsets = [0, 80], sizes = [8, 8], strides = [1, 1]} : vector<8x96xf32> to vector<8x8xf32>
    %84 = arith.truncf %83 : vector<8x8xf32> to vector<8x8xbf16>
    %cst_28 = arith.constant dense<0.000000e+00> : vector<8x8xf32>
    %85 = tpu.matmul %80, %82, %cst_28 {dimension_numbers = #tpu.dot_dimension_numbers<[1], [1], [0], [0], [0, 0, 1, 0], [], []>} : vector<8x8xbf16>, vector<8x8xbf16>, vector<8x8xf32> -> vector<8x8xf32>
    %cst_29 = arith.constant -1.000000e+09 : f32
    %86 = vector.broadcast %cst_29 : f32 to vector<8x8xf32>
    %87 = arith.select %34, %85, %86 : vector<8x8xi1>, vector<8x8xf32>
    %cst_30 = arith.constant dense<0xFF800000> : vector<8xf32>
    %88 = vector.multi_reduction <maximumf>, %87, %cst_30 [1] : vector<8x8xf32> to vector<8xf32>
    %89 = vector.shape_cast %88 : vector<8xf32> to vector<8x1xf32>
    %90 = vector.broadcast %89 : vector<8x1xf32> to vector<8x8xf32>
    %91 = arith.subf %87, %90 : vector<8x8xf32>
    %92 = math.exp %91 : vector<8x8xf32>
    %cst_31 = arith.constant dense<0.000000e+00> : vector<8xf32>
    %93 = vector.multi_reduction <add>, %92, %cst_31 [1] : vector<8x8xf32> to vector<8xf32>
    %94 = vector.shape_cast %93 : vector<8xf32> to vector<8x1xf32>
    %95 = tpu.reciprocal %94 {approx = true} : vector<8x1xf32> -> vector<8x1xf32>
    %96 = vector.broadcast %95 : vector<8x1xf32> to vector<8x8xf32>
    %97 = arith.mulf %92, %96 : vector<8x8xf32>
    %98 = arith.truncf %97 : vector<8x8xf32> to vector<8x8xbf16>
    %cst_32 = arith.constant dense<0.000000e+00> : vector<8x8xf32>
    %99 = tpu.matmul %98, %84, %cst_32 {dimension_numbers = #tpu.dot_dimension_numbers<[1], [0], [0], [1], [0, 0, 1, 1], [], []>} : vector<8x8xbf16>, vector<8x8xbf16>, vector<8x8xf32> -> vector<8x8xf32>
    %c0_33 = arith.constant 0 : index
    %c16 = arith.constant 16 : index
    %100 = vector.load %arg15[%c0_33, %c16] : memref<8x32xf32, #tpu.memory_space<vmem>>, vector<8x8xf32>
    tpu.vector_store %arg15[%c0_33, %c16], %99 {strides = array<i32>} : memref<8x32xf32, #tpu.memory_space<vmem>>, vector<8x8xf32>,
    %101 = vector.extract_strided_slice %31 {offsets = [0, 24], sizes = [8, 8], strides = [1, 1]} : vector<8x96xf32> to vector<8x8xf32>
    %102 = arith.truncf %101 : vector<8x8xf32> to vector<8x8xbf16>
    %103 = vector.extract_strided_slice %31 {offsets = [0, 56], sizes = [8, 8], strides = [1, 1]} : vector<8x96xf32> to vector<8x8xf32>
    %104 = arith.truncf %103 : vector<8x8xf32> to vector<8x8xbf16>
    %105 = vector.extract_strided_slice %31 {offsets = [0, 88], sizes = [8, 8], strides = [1, 1]} : vector<8x96xf32> to vector<8x8xf32>
    %106 = arith.truncf %105 : vector<8x8xf32> to vector<8x8xbf16>
    %cst_34 = arith.constant dense<0.000000e+00> : vector<8x8xf32>
    %107 = tpu.matmul %102, %104, %cst_34 {dimension_numbers = #tpu.dot_dimension_numbers<[1], [1], [0], [0], [0, 0, 1, 0], [], []>} : vector<8x8xbf16>, vector<8x8xbf16>, vector<8x8xf32> -> vector<8x8xf32>
    %cst_35 = arith.constant -1.000000e+09 : f32
    %108 = vector.broadcast %cst_35 : f32 to vector<8x8xf32>
    %109 = arith.select %34, %107, %108 : vector<8x8xi1>, vector<8x8xf32>
    %cst_36 = arith.constant dense<0xFF800000> : vector<8xf32>
    %110 = vector.multi_reduction <maximumf>, %109, %cst_36 [1] : vector<8x8xf32> to vector<8xf32>
    %111 = vector.shape_cast %110 : vector<8xf32> to vector<8x1xf32>
    %112 = vector.broadcast %111 : vector<8x1xf32> to vector<8x8xf32>
    %113 = arith.subf %109, %112 : vector<8x8xf32>
    %114 = math.exp %113 : vector<8x8xf32>
    %cst_37 = arith.constant dense<0.000000e+00> : vector<8xf32>
    %115 = vector.multi_reduction <add>, %114, %cst_37 [1] : vector<8x8xf32> to vector<8xf32>
    %116 = vector.shape_cast %115 : vector<8xf32> to vector<8x1xf32>
    %117 = tpu.reciprocal %116 {approx = true} : vector<8x1xf32> -> vector<8x1xf32>
    %118 = vector.broadcast %117 : vector<8x1xf32> to vector<8x8xf32>
    %119 = arith.mulf %114, %118 : vector<8x8xf32>
    %120 = arith.truncf %119 : vector<8x8xf32> to vector<8x8xbf16>
    %cst_38 = arith.constant dense<0.000000e+00> : vector<8x8xf32>
    %121 = tpu.matmul %120, %106, %cst_38 {dimension_numbers = #tpu.dot_dimension_numbers<[1], [0], [0], [1], [0, 0, 1, 1], [], []>} : vector<8x8xbf16>, vector<8x8xbf16>, vector<8x8xf32> -> vector<8x8xf32>
    %c0_39 = arith.constant 0 : index
    %c24 = arith.constant 24 : index
    %122 = vector.load %arg15[%c0_39, %c24] : memref<8x32xf32, #tpu.memory_space<vmem>>, vector<8x8xf32>
    tpu.vector_store %arg15[%c0_39, %c24], %121 {strides = array<i32>} : memref<8x32xf32, #tpu.memory_space<vmem>>, vector<8x8xf32>,
    %c0_40 = arith.constant 0 : index
    %c0_41 = arith.constant 0 : index
    %123 = vector.load %arg7[%c0_40, %c0_41] : memref<1x32xf32, #tpu.memory_space<vmem>>, vector<1x32xf32>
    %124 = vector.broadcast %123 : vector<1x32xf32> to vector<8x32xf32>
    %125 = arith.addf %1, %124 : vector<8x32xf32>
    %c0_42 = arith.constant 0 : index
    %c0_43 = arith.constant 0 : index
    %126 = vector.load %arg15[%c0_42, %c0_43] : memref<8x32xf32, #tpu.memory_space<vmem>>, vector<8x32xf32>
    %127 = arith.truncf %126 : vector<8x32xf32> to vector<8x32xbf16>
    %c0_44 = arith.constant 0 : index
    %c0_45 = arith.constant 0 : index
    %128 = vector.load %arg6[%c0_44, %c0_45] : memref<32x32xbf16, #tpu.memory_space<vmem>>, vector<32x32xbf16>
    %cst_46 = arith.constant dense<0.000000e+00> : vector<8x32xf32>
    %129 = tpu.matmul %127, %128, %cst_46 {dimension_numbers = #tpu.dot_dimension_numbers<[1], [0], [0], [1], [0, 0, 1, 1], [], []>} : vector<8x32xbf16>, vector<32x32xbf16>, vector<8x32xf32> -> vector<8x32xf32>
    %130 = arith.addf %125, %129 : vector<8x32xf32>
    %cst_47 = arith.constant dense<0.000000e+00> : vector<8xf32>
    %131 = vector.multi_reduction <add>, %130, %cst_47 [1] : vector<8x32xf32> to vector<8xf32>
    %132 = vector.shape_cast %131 : vector<8xf32> to vector<8x1xf32>
    %cst_48 = arith.constant 3.200000e+01 : f32
    %133 = vector.broadcast %cst_48 : f32 to vector<8x1xf32>
    %134 = arith.divf %132, %133 : vector<8x1xf32>
    %135 = vector.broadcast %134 : vector<8x1xf32> to vector<8x32xf32>
    %136 = arith.subf %130, %135 : vector<8x32xf32>
    %137 = arith.mulf %136, %136 : vector<8x32xf32>
    %cst_49 = arith.constant dense<0.000000e+00> : vector<8xf32>
    %138 = vector.multi_reduction <add>, %137, %cst_49 [1] : vector<8x32xf32> to vector<8xf32>
    %139 = vector.shape_cast %138 : vector<8xf32> to vector<8x1xf32>
    %cst_50 = arith.constant 3.200000e+01 : f32
    %140 = vector.broadcast %cst_50 : f32 to vector<8x1xf32>
    %141 = arith.divf %139, %140 : vector<8x1xf32>
    %142 = vector.broadcast %134 : vector<8x1xf32> to vector<8x32xf32>
    %143 = arith.subf %130, %142 : vector<8x32xf32>
    %cst_51 = arith.constant 9.99999974E-6 : f32
    %144 = vector.broadcast %cst_51 : f32 to vector<8x1xf32>
    %145 = arith.addf %141, %144 : vector<8x1xf32>
    %146 = math.rsqrt %145 : vector<8x1xf32>
    %147 = vector.broadcast %146 : vector<8x1xf32> to vector<8x32xf32>
    %148 = arith.mulf %143, %147 : vector<8x32xf32>
    %c0_52 = arith.constant 0 : index
    %c0_53 = arith.constant 0 : index
    %149 = vector.load %arg8[%c0_52, %c0_53] : memref<1x32xf32, #tpu.memory_space<vmem>>, vector<1x32xf32>
    %150 = vector.broadcast %149 : vector<1x32xf32> to vector<8x32xf32>
    %151 = arith.mulf %148, %150 : vector<8x32xf32>
    %c0_54 = arith.constant 0 : index
    %c0_55 = arith.constant 0 : index
    %152 = vector.load %arg9[%c0_54, %c0_55] : memref<1x32xf32, #tpu.memory_space<vmem>>, vector<1x32xf32>
    %153 = vector.broadcast %152 : vector<1x32xf32> to vector<8x32xf32>
    %154 = arith.addf %151, %153 : vector<8x32xf32>
    %155 = arith.truncf %154 : vector<8x32xf32> to vector<8x32xbf16>
    %c0_56 = arith.constant 0 : index
    %c0_57 = arith.constant 0 : index
    %156 = vector.load %arg10[%c0_56, %c0_57] : memref<32x128xbf16, #tpu.memory_space<vmem>>, vector<32x128xbf16>
    %cst_58 = arith.constant dense<0.000000e+00> : vector<8x128xf32>
    %157 = tpu.matmul %155, %156, %cst_58 {dimension_numbers = #tpu.dot_dimension_numbers<[1], [0], [0], [1], [0, 0, 1, 1], [], []>} : vector<8x32xbf16>, vector<32x128xbf16>, vector<8x128xf32> -> vector<8x128xf32>
    %c0_59 = arith.constant 0 : index
    %c0_60 = arith.constant 0 : index
    %158 = vector.load %arg11[%c0_59, %c0_60] : memref<1x128xf32, #tpu.memory_space<vmem>>, vector<1x128xf32>
    %159 = vector.broadcast %158 : vector<1x128xf32> to vector<8x128xf32>
    %160 = arith.addf %157, %159 : vector<8x128xf32>
    %cst_61 = arith.constant 1.702000e+00 : f32
    %161 = vector.broadcast %cst_61 : f32 to vector<8x128xf32>
    %162 = arith.mulf %161, %160 : vector<8x128xf32>
    %163 = arith.negf %162 : vector<8x128xf32>
    %164 = math.exp %163 : vector<8x128xf32>
    %cst_62 = arith.constant 1.000000e+00 : f32
    %165 = vector.broadcast %cst_62 : f32 to vector<8x128xf32>
    %166 = arith.addf %165, %164 : vector<8x128xf32>
    %167 = arith.divf %165, %166 : vector<8x128xf32>
    %168 = arith.mulf %160, %167 : vector<8x128xf32>
    %169 = arith.truncf %168 : vector<8x128xf32> to vector<8x128xbf16>
    %c0_63 = arith.constant 0 : index
    %c0_64 = arith.constant 0 : index
    %170 = vector.load %arg12[%c0_63, %c0_64] : memref<128x32xbf16, #tpu.memory_space<vmem>>, vector<128x32xbf16>
    %cst_65 = arith.constant dense<0.000000e+00> : vector<8x32xf32>
    %171 = tpu.matmul %169, %170, %cst_65 {dimension_numbers = #tpu.dot_dimension_numbers<[1], [0], [0], [1], [0, 0, 1, 1], [], []>} : vector<8x128xbf16>, vector<128x32xbf16>, vector<8x32xf32> -> vector<8x32xf32>
    %c0_66 = arith.constant 0 : index
    %c0_67 = arith.constant 0 : index
    %172 = vector.load %arg13[%c0_66, %c0_67] : memref<1x32xf32, #tpu.memory_space<vmem>>, vector<1x32xf32>
    %173 = vector.broadcast %172 : vector<1x32xf32> to vector<8x32xf32>
    %174 = arith.addf %171, %173 : vector<8x32xf32>
    %175 = arith.addf %130, %174 : vector<8x32xf32>
    %c0_68 = arith.constant 0 : index
    %c0_69 = arith.constant 0 : index
    %c0_70 = arith.constant 0 : index
    %176 = vector.load %arg14[%c0_68, %c0_69, %c0_70] : memref<1x8x32xf32, #tpu.memory_space<vmem>>, vector<1x8x32xf32>
    %177 = vector.shape_cast %176 : vector<1x8x32xf32> to vector<8x32xf32>
    %178 = vector.shape_cast %175 : vector<8x32xf32> to vector<1x8x32xf32>
    tpu.vector_store %arg14[%c0_68, %c0_69, %c0_70], %178 {strides = array<i32>} : memref<1x8x32xf32, #tpu.memory_space<vmem>>, vector<1x8x32xf32>,
    return
  }
  func.func @transform_0(%arg0: i32) -> (i32, i32, i32) {
    %c0_i32 = arith.constant 0 : i32
    %c0_i32_0 = arith.constant 0 : i32
    %c0_i32_1 = arith.constant 0 : i32
    return %arg0, %c0_i32, %c0_i32_0 : i32, i32, i32
  }
  func.func @transform_1(%arg0: i32) -> (i32, i32) {
    %c0_i32 = arith.constant 0 : i32
    %c0_i32_0 = arith.constant 0 : i32
    %c0_i32_1 = arith.constant 0 : i32
    return %c0_i32, %c0_i32_0 : i32, i32
  }
  func.func @transform_2(%arg0: i32) -> (i32, i32) {
    %c0_i32 = arith.constant 0 : i32
    %c0_i32_0 = arith.constant 0 : i32
    %c0_i32_1 = arith.constant 0 : i32
    return %c0_i32, %c0_i32_0 : i32, i32
  }
  func.func @transform_3(%arg0: i32) -> (i32, i32) {
    %c0_i32 = arith.constant 0 : i32
    %c0_i32_0 = arith.constant 0 : i32
    %c0_i32_1 = arith.constant 0 : i32
    return %c0_i32, %c0_i32_0 : i32, i32
  }
  func.func @transform_4(%arg0: i32) -> (i32, i32) {
    %c0_i32 = arith.constant 0 : i32
    %c0_i32_0 = arith.constant 0 : i32
    %c0_i32_1 = arith.constant 0 : i32
    return %c0_i32, %c0_i32_0 : i32, i32
  }
  func.func @transform_5(%arg0: i32) -> (i32, i32) {
    %c0_i32 = arith.constant 0 : i32
    %c0_i32_0 = arith.constant 0 : i32
    %c0_i32_1 = arith.constant 0 : i32
    return %c0_i32, %c0_i32_0 : i32, i32
  }
  func.func @transform_6(%arg0: i32) -> (i32, i32) {
    %c0_i32 = arith.constant 0 : i32
    %c0_i32_0 = arith.constant 0 : i32
    %c0_i32_1 = arith.constant 0 : i32
    return %c0_i32, %c0_i32_0 : i32, i32
  }
  func.func @transform_7(%arg0: i32) -> (i32, i32) {
    %c0_i32 = arith.constant 0 : i32
    %c0_i32_0 = arith.constant 0 : i32
    %c0_i32_1 = arith.constant 0 : i32
    return %c0_i32, %c0_i32_0 : i32, i32
  }
  func.func @transform_8(%arg0: i32) -> (i32, i32) {
    %c0_i32 = arith.constant 0 : i32
    %c0_i32_0 = arith.constant 0 : i32
    %c0_i32_1 = arith.constant 0 : i32
    return %c0_i32, %c0_i32_0 : i32, i32
  }
  func.func @transform_9(%arg0: i32) -> (i32, i32) {
    %c0_i32 = arith.constant 0 : i32
    %c0_i32_0 = arith.constant 0 : i32
    %c0_i32_1 = arith.constant 0 : i32
    return %c0_i32, %c0_i32_0 : i32, i32
  }
  func.func @transform_10(%arg0: i32) -> (i32, i32) {
    %c0_i32 = arith.constant 0 : i32
    %c0_i32_0 = arith.constant 0 : i32
    %c0_i32_1 = arith.constant 0 : i32
    return %c0_i32, %c0_i32_0 : i32, i32
  }
  func.func @transform_11(%arg0: i32) -> (i32, i32) {
    %c0_i32 = arith.constant 0 : i32
    %c0_i32_0 = arith.constant 0 : i32
    %c0_i32_1 = arith.constant 0 : i32
    return %c0_i32, %c0_i32_0 : i32, i32
  }
  func.func @transform_12(%arg0: i32) -> (i32, i32) {
    %c0_i32 = arith.constant 0 : i32
    %c0_i32_0 = arith.constant 0 : i32
    %c0_i32_1 = arith.constant 0 : i32
    return %c0_i32, %c0_i32_0 : i32, i32
  }
  func.func @transform_13(%arg0: i32) -> (i32, i32, i32) {
    %c0_i32 = arith.constant 0 : i32
    %c0_i32_0 = arith.constant 0 : i32
    %c0_i32_1 = arith.constant 0 : i32
    return %arg0, %c0_i32, %c0_i32_0 : i32, i32, i32
  }
}

</mosaic_0001>

<llo_original>
// kernel: tpu_custom_call.1
$region0: #{tpu_custom_call.1}
  #allocation0 [shape = 'u32[]', space=smem, size = 0x4, offset = 0x4, fixed_abs, tag = 'smem constant byte address 0x4 - core index']
  #allocation1 [shape = 'u32[72,128]{1,0:T(1,128)}', space=vmem, size = 0x9000, scoped, tag = 'internal scratch']
  #allocation2 [shape = 'f32[8,32]{1,0:T(8,128)}', space=vmem, size = 0x1000, scoped, tag = 'scratch operand']
  %s0 = inlined_call_operand.vmem [shape: f32[2,8,32], index: 0, kind: input, shape index: {}]
  %s1 = inlined_call_operand.vmem [shape: f32[1,32], index: 1, kind: input, shape index: {}]
  %s2 = inlined_call_operand.vmem [shape: f32[1,32], index: 2, kind: input, shape index: {}]
  %s3 = inlined_call_operand.vmem [shape: bf16[32,96], index: 3, kind: input, shape index: {}]
  %s4 = inlined_call_operand.vmem [shape: f32[1,96], index: 4, kind: input, shape index: {}]
  %s5 = inlined_call_operand.vmem [shape: bf16[32,32], index: 5, kind: input, shape index: {}]
  %s6 = inlined_call_operand.vmem [shape: f32[1,32], index: 6, kind: input, shape index: {}]
  %s7 = inlined_call_operand.vmem [shape: f32[1,32], index: 7, kind: input, shape index: {}]
  %s8 = inlined_call_operand.vmem [shape: f32[1,32], index: 8, kind: input, shape index: {}]
  %s9 = inlined_call_operand.vmem [shape: bf16[32,128], index: 9, kind: input, shape index: {}]
  %s10 = inlined_call_operand.vmem [shape: f32[1,128], index: 10, kind: input, shape index: {}]
  %s11 = inlined_call_operand.vmem [shape: bf16[128,32], index: 11, kind: input, shape index: {}]
  %s12 = inlined_call_operand.vmem [shape: f32[1,32], index: 12, kind: input, shape index: {}]
  %s13 = inlined_call_operand.hbm [shape: f32[2,8,32], index: 13, kind: output, shape index: {}]
  %s14 = sld [smem:[#allocation0]]
  $region85: #{tpu_custom_call.1} parent=0
    _
  %s16 = ssub.s32 1, %s14
  %s17 = scalar_select 0, %s16, %s14
  $region1: #{tpu_custom_call.1} parent=0
    #allocation3 [shape = 'u8[8192]{0}', space=vmem, size = 0x2000, scoped, tag = 'output window, operand 0']
    #allocation4 [shape = 's32[2]{0}', space=sflag, size = 0x8, scoped, tag = 'scoped memory for tpu_custom_call.1']
    %18 = vsyncpa [#allocation4], 0
    %s19 = scalar_lea.sflag [#allocation4], 1
    %20 = vsyncpa %s19, 0
    loop: start=0, step=1, limit=4
    $region2: #{tpu_custom_call.1} parent=1 // loop_pre_header
      _
    $region3: #{tpu_custom_call.1} parent=1 // loop_header
      %s22 = sphi 0, %s26
      %p23 = scmp.ge.s32.totalorder %s22, 4
      %s32 = sphi 0, %s34
      %s35 = sphi 0, %s32
      %s36 = sphi 0, %s35
      %s52 = sphi 0, %s36
      %s56 = sphi 0, %s56
      %s58 = sphi 0, %s56
      %s59 = sphi 0, %s58
      %s73 = sphi 0, %s59
      %s77 = sphi 0, %s77
      %s79 = sphi 0, %s77
      %s80 = sphi 0, %s79
      %s94 = sphi 0, %s80
      %s98 = sphi 0, %s98
      %s100 = sphi 0, %s98
      %s101 = sphi 0, %s100
      %s115 = sphi 0, %s101
      %s119 = sphi 0, %s119
      %s121 = sphi 0, %s119
      %s122 = sphi 0, %s121
      %s136 = sphi 0, %s122
      %s140 = sphi 0, %s140
      %s142 = sphi 0, %s140
      %s143 = sphi 0, %s142
      %s157 = sphi 0, %s143
      %s161 = sphi 0, %s161
      %s163 = sphi 0, %s161
      %s164 = sphi 0, %s163
      %s178 = sphi 0, %s164
      %s182 = sphi 0, %s182
      %s184 = sphi 0, %s182
      %s185 = sphi 0, %s184
      %s199 = sphi 0, %s185
      %s203 = sphi 0, %s203
      %s205 = sphi 0, %s203
      %s206 = sphi 0, %s205
      %s220 = sphi 0, %s206
      %s224 = sphi 0, %s224
      %s226 = sphi 0, %s224
      %s227 = sphi 0, %s226
      %s241 = sphi 0, %s227
      %s245 = sphi 0, %s245
      %s247 = sphi 0, %s245
      %s248 = sphi 0, %s247
      %s262 = sphi 0, %s248
      %s266 = sphi 0, %s266
      %s268 = sphi 0, %s266
      %s269 = sphi 0, %s268
      %s283 = sphi 0, %s269
      %s287 = sphi 0, %s287
      %s289 = sphi 0, %s287
      %s290 = sphi 0, %s289
      %s304 = sphi 0, %s290
      %s310 = sphi 0, %s312
      %s313 = sphi 0, %s310
      %s314 = sphi 0, %s313
      %s330 = sphi 0, %s314
    $region4: #{tpu_custom_call.1} parent=1 // loop_header_branch
      %25 = sbr.rel (%p23) target = $region8
    $region5: #{tpu_custom_call.1} parent=1 // loop_body
      %s27 = ssub.s32 %s22, 1
      %s28 = ssub.s32 %s22, 2
      %s29 = sadd.s32 %s22, 1
      %s30 = ssub.s32 %s22, %s29
      %p31 = scmp.eq.s32.totalorder %s30, 0
      %s33 = sadd.s32 %s32, 1
      %s34 = scalar_select %p31, %s32, %s33
      %p37 = pneg %p31
      %p38 = scmp.eq.s32.totalorder %s22, 1
      %p39 = por %p37, %p38
      %p40 = scmp.ne.s32.totalorder %s32, %s35
      %p41 = scmp.eq.s32.totalorder %s22, 0
      %p42 = por %p40, %p41
      %p43 = scmp.ne.s32.totalorder %s32, %s35
      %p44 = scmp.eq.s32.totalorder %s27, 1
      %p45 = por %p43, %p44
      %p46 = scmp.ne.s32.totalorder %s35, %s36
      %p47 = scmp.eq.s32.totalorder %s27, 0
      %p48 = por %p46, %p47
      %p49 = scmp.ne.s32.totalorder %s35, %s36
      %p50 = scmp.eq.s32.totalorder %s28, 1
      %p51 = por %p49, %p50
      %p53 = scmp.ne.s32.totalorder %s36, %s52
      %p54 = scmp.eq.s32.totalorder %s28, 0
      %p55 = por %p53, %p54
      %s57 = sadd.s32 %s56, 1
      %p60 = scmp.eq.s32.totalorder %s22, 1
      %p61 = scmp.ne.s32.totalorder %s56, %s58
      %p62 = scmp.eq.s32.totalorder %s22, 0
      %p63 = por %p61, %p62
      %p64 = scmp.ne.s32.totalorder %s56, %s58
      %p65 = scmp.eq.s32.totalorder %s27, 1
      %p66 = por %p64, %p65
      %p67 = scmp.ne.s32.totalorder %s58, %s59
      %p68 = scmp.eq.s32.totalorder %s27, 0
      %p69 = por %p67, %p68
      %p70 = scmp.ne.s32.totalorder %s58, %s59
      %p71 = scmp.eq.s32.totalorder %s28, 1
      %p72 = por %p70, %p71
      %p74 = scmp.ne.s32.totalorder %s59, %s73
      %p75 = scmp.eq.s32.totalorder %s28, 0
      %p76 = por %p74, %p75
      %s78 = sadd.s32 %s77, 1
      %p81 = scmp.eq.s32.totalorder %s22, 1
      %p82 = scmp.ne.s32.totalorder %s77, %s79
      %p83 = scmp.eq.s32.totalorder %s22, 0
      %p84 = por %p82, %p83
      %p85 = scmp.ne.s32.totalorder %s77, %s79
      %p86 = scmp.eq.s32.totalorder %s27, 1
      %p87 = por %p85, %p86
      %p88 = scmp.ne.s32.totalorder %s79, %s80
      %p89 = scmp.eq.s32.totalorder %s27, 0
      %p90 = por %p88, %p89
      %p91 = scmp.ne.s32.totalorder %s79, %s80
      %p92 = scmp.eq.s32.totalorder %s28, 1
      %p93 = por %p91, %p92
      %p95 = scmp.ne.s32.totalorder %s80, %s94
      %p96 = scmp.eq.s32.totalorder %s28, 0
      %p97 = por %p95, %p96
      %s99 = sadd.s32 %s98, 1
      %p102 = scmp.eq.s32.totalorder %s22, 1
      %p103 = scmp.ne.s32.totalorder %s98, %s100
      %p104 = scmp.eq.s32.totalorder %s22, 0
      %p105 = por %p103, %p104
      %p106 = scmp.ne.s32.totalorder %s98, %s100
      %p107 = scmp.eq.s32.totalorder %s27, 1
      %p108 = por %p106, %p107
      %p109 = scmp.ne.s32.totalorder %s100, %s101
      %p110 = scmp.eq.s32.totalorder %s27, 0
      %p111 = por %p109, %p110
      %p112 = scmp.ne.s32.totalorder %s100, %s101
      %p113 = scmp.eq.s32.totalorder %s28, 1
      %p114 = por %p112, %p113
      %p116 = scmp.ne.s32.totalorder %s101, %s115
      %p117 = scmp.eq.s32.totalorder %s28, 0
      %p118 = por %p116, %p117
      %s120 = sadd.s32 %s119, 1
      %p123 = scmp.eq.s32.totalorder %s22, 1
      %p124 = scmp.ne.s32.totalorder %s119, %s121
      %p125 = scmp.eq.s32.totalorder %s22, 0
      %p126 = por %p124, %p125
      %p127 = scmp.ne.s32.totalorder %s119, %s121
      %p128 = scmp.eq.s32.totalorder %s27, 1
      %p129 = por %p127, %p128
      %p130 = scmp.ne.s32.totalorder %s121, %s122
      %p131 = scmp.eq.s32.totalorder %s27, 0
      %p132 = por %p130, %p131
      %p133 = scmp.ne.s32.totalorder %s121, %s122
      %p134 = scmp.eq.s32.totalorder %s28, 1
      %p135 = por %p133, %p134
      %p137 = scmp.ne.s32.totalorder %s122, %s136
      %p138 = scmp.eq.s32.totalorder %s28, 0
      %p139 = por %p137, %p138
      %s141 = sadd.s32 %s140, 1
      %p144 = scmp.eq.s32.totalorder %s22, 1
      %p145 = scmp.ne.s32.totalorder %s140, %s142
      %p146 = scmp.eq.s32.totalorder %s22, 0
      %p147 = por %p145, %p146
      %p148 = scmp.ne.s32.totalorder %s140, %s142
      %p149 = scmp.eq.s32.totalorder %s27, 1
      %p150 = por %p148, %p149
      %p151 = scmp.ne.s32.totalorder %s142, %s143
      %p152 = scmp.eq.s32.totalorder %s27, 0
      %p153 = por %p151, %p152
      %p154 = scmp.ne.s32.totalorder %s142, %s143
      %p155 = scmp.eq.s32.totalorder %s28, 1
      %p156 = por %p154, %p155
      %p158 = scmp.ne.s32.totalorder %s143, %s157
      %p159 = scmp.eq.s32.totalorder %s28, 0
      %p160 = por %p158, %p159
      %s162 = sadd.s32 %s161, 1
      %p165 = scmp.eq.s32.totalorder %s22, 1
      %p166 = scmp.ne.s32.totalorder %s161, %s163
      %p167 = scmp.eq.s32.totalorder %s22, 0
      %p168 = por %p166, %p167
      %p169 = scmp.ne.s32.totalorder %s161, %s163
      %p170 = scmp.eq.s32.totalorder %s27, 1
      %p171 = por %p169, %p170
      %p172 = scmp.ne.s32.totalorder %s163, %s164
      %p173 = scmp.eq.s32.totalorder %s27, 0
      %p174 = por %p172, %p173
      %p175 = scmp.ne.s32.totalorder %s163, %s164
      %p176 = scmp.eq.s32.totalorder %s28, 1
      %p177 = por %p175, %p176
      %p179 = scmp.ne.s32.totalorder %s164, %s178
      %p180 = scmp.eq.s32.totalorder %s28, 0
      %p181 = por %p179, %p180
      %s183 = sadd.s32 %s182, 1
      %p186 = scmp.eq.s32.totalorder %s22, 1
      %p187 = scmp.ne.s32.totalorder %s182, %s184
      %p188 = scmp.eq.s32.totalorder %s22, 0
      %p189 = por %p187, %p188
      %p190 = scmp.ne.s32.totalorder %s182, %s184
      %p191 = scmp.eq.s32.totalorder %s27, 1
      %p192 = por %p190, %p191
      %p193 = scmp.ne.s32.totalorder %s184, %s185
      %p194 = scmp.eq.s32.totalorder %s27, 0
      %p195 = por %p193, %p194
      %p196 = scmp.ne.s32.totalorder %s184, %s185
      %p197 = scmp.eq.s32.totalorder %s28, 1
      %p198 = por %p196, %p197
      %p200 = scmp.ne.s32.totalorder %s185, %s199
      %p201 = scmp.eq.s32.totalorder %s28, 0
      %p202 = por %p200, %p201
      %s204 = sadd.s32 %s203, 1
      %p207 = scmp.eq.s32.totalorder %s22, 1
      %p208 = scmp.ne.s32.totalorder %s203, %s205
      %p209 = scmp.eq.s32.totalorder %s22, 0
      %p210 = por %p208, %p209
      %p211 = scmp.ne.s32.totalorder %s203, %s205
      %p212 = scmp.eq.s32.totalorder %s27, 1
      %p213 = por %p211, %p212
      %p214 = scmp.ne.s32.totalorder %s205, %s206
      %p215 = scmp.eq.s32.totalorder %s27, 0
      %p216 = por %p214, %p215
      %p217 = scmp.ne.s32.totalorder %s205, %s206
      %p218 = scmp.eq.s32.totalorder %s28, 1
      %p219 = por %p217, %p218
      %p221 = scmp.ne.s32.totalorder %s206, %s220
      %p222 = scmp.eq.s32.totalorder %s28, 0
      %p223 = por %p221, %p222
      %s225 = sadd.s32 %s224, 1
      %p228 = scmp.eq.s32.totalorder %s22, 1
      %p229 = scmp.ne.s32.totalorder %s224, %s226
      %p230 = scmp.eq.s32.totalorder %s22, 0
      %p231 = por %p229, %p230
      %p232 = scmp.ne.s32.totalorder %s224, %s226
      %p233 = scmp.eq.s32.totalorder %s27, 1
      %p234 = por %p232, %p233
      %p235 = scmp.ne.s32.totalorder %s226, %s227
      %p236 = scmp.eq.s32.totalorder %s27, 0
      %p237 = por %p235, %p236
      %p238 = scmp.ne.s32.totalorder %s226, %s227
      %p239 = scmp.eq.s32.totalorder %s28, 1
      %p240 = por %p238, %p239
      %p242 = scmp.ne.s32.totalorder %s227, %s241
      %p243 = scmp.eq.s32.totalorder %s28, 0
      %p244 = por %p242, %p243
      %s246 = sadd.s32 %s245, 1
      %p249 = scmp.eq.s32.totalorder %s22, 1
      %p250 = scmp.ne.s32.totalorder %s245, %s247
      %p251 = scmp.eq.s32.totalorder %s22, 0
      %p252 = por %p250, %p251
      %p253 = scmp.ne.s32.totalorder %s245, %s247
      %p254 = scmp.eq.s32.totalorder %s27, 1
      %p255 = por %p253, %p254
      %p256 = scmp.ne.s32.totalorder %s247, %s248
      %p257 = scmp.eq.s32.totalorder %s27, 0
      %p258 = por %p256, %p257
      %p259 = scmp.ne.s32.totalorder %s247, %s248
      %p260 = scmp.eq.s32.totalorder %s28, 1
      %p261 = por %p259, %p260
      %p263 = scmp.ne.s32.totalorder %s248, %s262
      %p264 = scmp.eq.s32.totalorder %s28, 0
      %p265 = por %p263, %p264
      %s267 = sadd.s32 %s266, 1
      %p270 = scmp.eq.s32.totalorder %s22, 1
      %p271 = scmp.ne.s32.totalorder %s266, %s268
      %p272 = scmp.eq.s32.totalorder %s22, 0
      %p273 = por %p271, %p272
      %p274 = scmp.ne.s32.totalorder %s266, %s268
      %p275 = scmp.eq.s32.totalorder %s27, 1
      %p276 = por %p274, %p275
      %p277 = scmp.ne.s32.totalorder %s268, %s269
      %p278 = scmp.eq.s32.totalorder %s27, 0
      %p279 = por %p277, %p278
      %p280 = scmp.ne.s32.totalorder %s268, %s269
      %p281 = scmp.eq.s32.totalorder %s28, 1
      %p282 = por %p280, %p281
      %p284 = scmp.ne.s32.totalorder %s269, %s283
      %p285 = scmp.eq.s32.totalorder %s28, 0
      %p286 = por %p284, %p285
      %s288 = sadd.s32 %s287, 1
      %p291 = scmp.eq.s32.totalorder %s22, 1
      %p292 = scmp.ne.s32.totalorder %s287, %s289
      %p293 = scmp.eq.s32.totalorder %s22, 0
      %p294 = por %p292, %p293
      %p295 = scmp.ne.s32.totalorder %s287, %s289
      %p296 = scmp.eq.s32.totalorder %s27, 1
      %p297 = por %p295, %p296
      %p298 = scmp.ne.s32.totalorder %s289, %s290
      %p299 = scmp.eq.s32.totalorder %s27, 0
      %p300 = por %p298, %p299
      %p301 = scmp.ne.s32.totalorder %s289, %s290
      %p302 = scmp.eq.s32.totalorder %s28, 1
      %p303 = por %p301, %p302
      %p305 = scmp.ne.s32.totalorder %s290, %s304
      %p306 = scmp.eq.s32.totalorder %s28, 0
      %p307 = por %p305, %p306
      %s308 = ssub.s32 %s22, %s29
      %p309 = scmp.eq.s32.totalorder %s308, 0
      %s311 = sadd.s32 %s310, 1
      %s312 = scalar_select %p309, %s310, %s311
      %p315 = pneg %p309
      %p316 = scmp.eq.s32.totalorder %s22, 1
      %p317 = por %p315, %p316
      %p318 = scmp.ne.s32.totalorder %s310, %s313
      %p319 = scmp.eq.s32.totalorder %s22, 0
      %p320 = por %p318, %p319
      %p321 = scmp.ne.s32.totalorder %s310, %s313
      %p322 = scmp.eq.s32.totalorder %s27, 1
      %p323 = por %p321, %p322
      %p324 = scmp.ne.s32.totalorder %s313, %s314
      %p325 = scmp.eq.s32.totalorder %s27, 0
      %p326 = por %p324, %p325
      %p327 = scmp.ne.s32.totalorder %s313, %s314
      %p328 = scmp.eq.s32.totalorder %s28, 1
      %p329 = por %p327, %p328
      %p331 = scmp.ne.s32.totalorder %s314, %s330
      %p332 = scmp.eq.s32.totalorder %s28, 0
      %p333 = por %p331, %p332
      %p334 = scmp.le.s32.totalorder 1, %s22
      %p335 = scmp.lt.s32.totalorder %s22, 3
      %p336 = pnand %p334, %p335
      %p337 = pneg %p336
      // Predicated region
      $region9: #{tpu_custom_call.1} parent=5 // pred_check
        _
      $region10: #{tpu_custom_call.1} parent=5 // pred_check_branch
        %339 = sbr.rel (%p336) target = $region12
      $region11: #{tpu_custom_call.1} parent=5 // pred_region
        %s340 = ssub.s32 %s22, 1
        // Predicated region
        $region13: #{tpu_custom_call.1} parent=11 // pred_check
          %p341 = pneg %p69
        $region14: #{tpu_custom_call.1} parent=11 // pred_check_branch
          %343 = sbr.rel (%p341) target = $region16
        $region15: #{tpu_custom_call.1} parent=11 // pred_region
          _
        $region16: #{tpu_custom_call.1} parent=11 // pred_fallthru
          _
        // Predicated region
        $region17: #{tpu_custom_call.1} parent=11 // pred_check
          %p344 = pneg %p90
        $region18: #{tpu_custom_call.1} parent=11 // pred_check_branch
          %346 = sbr.rel (%p344) target = $region20
        $region19: #{tpu_custom_call.1} parent=11 // pred_region
          _
        $region20: #{tpu_custom_call.1} parent=11 // pred_fallthru
          _
        // Predicated region
        $region21: #{tpu_custom_call.1} parent=11 // pred_check
          %p347 = pneg %p111
        $region22: #{tpu_custom_call.1} parent=11 // pred_check_branch
          %349 = sbr.rel (%p347) target = $region24
        $region23: #{tpu_custom_call.1} parent=11 // pred_region
          _
        $region24: #{tpu_custom_call.1} parent=11 // pred_fallthru
          _
        // Predicated region
        $region25: #{tpu_custom_call.1} parent=11 // pred_check
          %p350 = pneg %p132
        $region26: #{tpu_custom_call.1} parent=11 // pred_check_branch
          %352 = sbr.rel (%p350) target = $region28
        $region27: #{tpu_custom_call.1} parent=11 // pred_region
          _
        $region28: #{tpu_custom_call.1} parent=11 // pred_fallthru
          _
        // Predicated region
        $region29: #{tpu_custom_call.1} parent=11 // pred_check
          %p353 = pneg %p153
        $region30: #{tpu_custom_call.1} parent=11 // pred_check_branch
          %355 = sbr.rel (%p353) target = $region32
        $region31: #{tpu_custom_call.1} parent=11 // pred_region
          _
        $region32: #{tpu_custom_call.1} parent=11 // pred_fallthru
          _
        // Predicated region
        $region33: #{tpu_custom_call.1} parent=11 // pred_check
          %p356 = pneg %p174
        $region34: #{tpu_custom_call.1} parent=11 // pred_check_branch
          %358 = sbr.rel (%p356) target = $region36
        $region35: #{tpu_custom_call.1} parent=11 // pred_region
          _
        $region36: #{tpu_custom_call.1} parent=11 // pred_fallthru
          _
        // Predicated region
        $region37: #{tpu_custom_call.1} parent=11 // pred_check
          %p359 = pneg %p195
        $region38: #{tpu_custom_call.1} parent=11 // pred_check_branch
          %361 = sbr.rel (%p359) target = $region40
        $region39: #{tpu_custom_call.1} parent=11 // pred_region
          _
        $region40: #{tpu_custom_call.1} parent=11 // pred_fallthru
          _
        // Predicated region
        $region41: #{tpu_custom_call.1} parent=11 // pred_check
          %p362 = pneg %p216
        $region42: #{tpu_custom_call.1} parent=11 // pred_check_branch
          %364 = sbr.rel (%p362) target = $region44
        $region43: #{tpu_custom_call.1} parent=11 // pred_region
          _
        $region44: #{tpu_custom_call.1} parent=11 // pred_fallthru
          _
        // Predicated region
        $region45: #{tpu_custom_call.1} parent=11 // pred_check
          %p365 = pneg %p237
        $region46: #{tpu_custom_call.1} parent=11 // pred_check_branch
          %367 = sbr.rel (%p365) target = $region48
        $region47: #{tpu_custom_call.1} parent=11 // pred_region
          _
        $region48: #{tpu_custom_call.1} parent=11 // pred_fallthru
          _
        // Predicated region
        $region49: #{tpu_custom_call.1} parent=11 // pred_check
          %p368 = pneg %p258
        $region50: #{tpu_custom_call.1} parent=11 // pred_check_branch
          %370 = sbr.rel (%p368) target = $region52
        $region51: #{tpu_custom_call.1} parent=11 // pred_region
          _
        $region52: #{tpu_custom_call.1} parent=11 // pred_fallthru
          _
        // Predicated region
        $region53: #{tpu_custom_call.1} parent=11 // pred_check
          %p371 = pneg %p279
        $region54: #{tpu_custom_call.1} parent=11 // pred_check_branch
          %373 = sbr.rel (%p371) target = $region56
        $region55: #{tpu_custom_call.1} parent=11 // pred_region
          _
        $region56: #{tpu_custom_call.1} parent=11 // pred_fallthru
          _
        // Predicated region
        $region57: #{tpu_custom_call.1} parent=11 // pred_check
          %p374 = pneg %p300
        $region58: #{tpu_custom_call.1} parent=11 // pred_check_branch
          %376 = sbr.rel (%p374) target = $region60
        $region59: #{tpu_custom_call.1} parent=11 // pred_region
          _
        $region60: #{tpu_custom_call.1} parent=11 // pred_fallthru
          _
      $region12: #{tpu_custom_call.1} parent=5 // pred_fallthru
        _
      %p377 = scmp.lt.s32.totalorder %s22, 2
      // Predicated region
      $region61: #{tpu_custom_call.1} parent=5 // pred_check
        %p378 = pneg %p377
      $region62: #{tpu_custom_call.1} parent=5 // pred_check_branch
        %380 = sbr.rel (%p378) target = $region64
      $region63: #{tpu_custom_call.1} parent=5 // pred_region
        // Predicated region
        $region65: #{tpu_custom_call.1} parent=63 // pred_check
          %p381 = pneg %p42
        $region66: #{tpu_custom_call.1} parent=63 // pred_check_branch
          %383 = sbr.rel (%p381) target = $region68
        $region67: #{tpu_custom_call.1} parent=63 // pred_region
          %p384 = scmp.lt.s32.totalorder %s22, 1
          %s385 = scalar_select %p384, %s22, 1
          %s386 = smul.addr %s385, 8
          %s387 = scalar_lea.vmem %s0, %s386
        $region68: #{tpu_custom_call.1} parent=63 // pred_fallthru
          _
      $region64: #{tpu_custom_call.1} parent=5 // pred_fallthru
        _
      %p388 = scmp.le.s32.totalorder 1, %s22
      %p389 = scmp.lt.s32.totalorder %s22, 3
      %p390 = pnand %p388, %p389
      %p391 = pneg %p390
      // Predicated region
      $region69: #{tpu_custom_call.1} parent=5 // pred_check
        _
      $region70: #{tpu_custom_call.1} parent=5 // pred_check_branch
        %393 = sbr.rel (%p390) target = $region72
      $region71: #{tpu_custom_call.1} parent=5 // pred_region
        %s394 = ssub.s32 %s22, 1
        %p395 = scmp.lt.s32.totalorder %s27, 1
        %s396 = scalar_select %p395, %s27, 1
        %s397 = smul.addr %s396, 8
        %s398 = scalar_lea.vmem %s0, %s397
        %p399 = pneg %p48
        %p400 = pneg %p45
        %p401 = pneg %p69
        %p402 = pneg %p66
        %p403 = pneg %p90
        %p404 = pneg %p87
        %p405 = pneg %p111
        %p406 = pneg %p108
        %p407 = pneg %p132
        %p408 = pneg %p129
        %p409 = pneg %p153
        %p410 = pneg %p150
        %p411 = pneg %p174
        %p412 = pneg %p171
        %p413 = pneg %p195
        %p414 = pneg %p192
        %p415 = pneg %p216
        %p416 = pneg %p213
        %p417 = pneg %p237
        %p418 = pneg %p234
        %p419 = pneg %p258
        %p420 = pneg %p255
        %p421 = pneg %p279
        %p422 = pneg %p276
        %p423 = pneg %p300
        %p424 = pneg %p297
        %p425 = pneg %p326
        %p426 = pneg %p323
        %s427 = sand.u32 %s313, 1
        %s428 = scalar_lea.sflag [#allocation4], %s427
        %s429 = sand.u32 %s313, 1
        %s430 = smul.addr %s429, 8
        %s431 = scalar_lea.vmem [#allocation3], %s430
        %p432 = scmp.lt.s32.totalorder %s27, 1
        %s433 = scalar_select %p432, %s27, 1
        %s434 = smul.addr %s433, 8
        %s435 = scalar_lea.vmem %s0, %s434
        %v437 = vld [vmem:[%s435] sm:$0xff]
        %vm438 = vcmask 261120
        %v439 = vsel %vm438, %v437, 0.0
        %440 = vadd.xlane.f32.xlu0 %v439
        %v441 = vpop.xlane.xlu0 %440
        %v442 = vrcp.pop 32.0
        %v443 = vmul.f32 32.0, %v442
        %v444 = vsub.f32 1.0, %v443
        %v445 = vmul.f32 %v442, %v444
        %v446 = vadd.f32 %v442, %v445
        %vm447 = vweird.f32 %v442
        %v448 = vsel %vm447, %v442, %v446
        %v449 = vmul.f32 %v441, %v448
        %v450 = vsub.f32 %v437, %v449
        %v451 = vmul.f32 %v450, %v450
        %v452 = vsel %vm438, %v451, 0.0
        %453 = vadd.xlane.f32.xlu0 %v452
        %v454 = vpop.xlane.xlu0 %453
        %v455 = vmul.f32 %v454, %v448
        %v456 = vadd.f32 %v455, 1e-05
        %v457 = vrsqrt.pop %v456
        %v458 = vmul.f32 %v457, %v456
        %v459 = vmul.f32 %v458, %v457
        %v460 = vmul.f32 0.5, %v459
        %v461 = vsub.f32 1.5, %v460
        %v462 = vmul.f32 %v457, %v461
        %vm463 = vweird.f32 %v456
        %vm464 = vweird.f32 %v457
        %vm465 = vmor %vm463, %vm464
        %v466 = vsel %vm465, %v457, %v462
        %v467 = vmul.f32 %v450, %v466
        %v468 = vld [vmem:[%s1] sm:$0x1]
        %v470 = vperm.slane %v468, 0
        %v472 = vmul.f32 %v467, %v470
        %v473 = vld [vmem:[%s2] sm:$0x1]
        %v475 = vperm.slane %v473, 0
        %v477 = vadd.f32 %v472, %v475
        %v478 = vpack.c.bf16 %v477, %v477
        %v479 = vld [vmem:[%s3] sm:$0xf]
        %v480 = vld [vmem:[%s3 + $0x4] sm:$0xf]
        %v481 = vld [vmem:[%s3 + $0x8] sm:$0xf]
        %v482 = vld [vmem:[%s3 + $0xc] sm:$0xf]
        %v483 = vld [vmem:[%s4] sm:$0x1]
        %v485 = vperm.slane %v483, 0
        %v491 = vunpack.c.l.b16 %v479
        %v492 = vunpack.c.l.b16 %v480
        %v493 = vunpack.c.l.b16 %v481
        %v494 = vunpack.c.l.b16 %v482
        %v495 = vpack.c.b16 %v492, %v491
        %v496 = vpack.c.b16 %v494, %v493
        %v500 = vsel %vm438, %v478, 0
        %502 = vmatpush.bf16.msra.mxu0 0
        %503 = vmatpush.bf16.msra.mxu0 0
        %504 = vmatpush.bf16.msra.mxu0 0
        %505 = vmatpush.bf16.msra.mxu0 0
        %506 = vmatpush.bf16.msra.mxu0 0
        %507 = vmatpush.bf16.msra.mxu0 0
        %508 = vmatpush.bf16.msra.mxu0 %v496
        %509 = vmatpush.bf16.msra.mxu0 %v495
        %510 = vmatmul.bf16.gmra.mxu0 %v500
        %v511 = vpop.f32.mrf.mxu0
        %v512 = vadd.f32 %v485, %v511
        %v513 = vpop.f32.mrf.mxu0
        %514 = vdwg.mxu0
        %v515 = vlaneseq
        %v516 = vshrl.u32 %v515, 7
        %v517 = vlaneseq
        %v518 = vand.u32 %v517, 127
        %vm519 = vcmp.le.s32.totalorder %v518, %v516
        %v520 = vpack.c.bf16 %v512, %v512
        %522 = vrot.lane.b32.xlu0 %v520, 96
        %v523 = vpop.permute.xlu0 %522
        %vm524 = vcmask 64512
        %v526 = vsel %vm524, %v520, 0
        %v529 = vsel %vm524, %v523, 0
        %531 = vmatpush.bf16.xpose.msra.mxu0 0
        %532 = vmatpush.bf16.xpose.msra.mxu0 0
        %533 = vmatpush.bf16.xpose.msra.mxu0 0
        %534 = vmatpush.bf16.xpose.msra.mxu0 0
        %535 = vmatpush.bf16.xpose.msra.mxu0 0
        %536 = vmatpush.bf16.xpose.msra.mxu0 0
        %537 = vmatpush.bf16.xpose.msra.mxu0 0
        %538 = vmatpush.bf16.xpose.msra.mxu0 %v529
        %539 = vmatmul.bf16.gmra.mxu0 %v526
        %v540 = vpop.f32.mrf.mxu0
        %v541 = vadd.f32 0.0, %v540
        %v542 = vpop.f32.mrf.mxu0
        %543 = vdwg.mxu0
        %v544 = vsel %vm519, %v541, -1e+09
        %v545 = vsel %vm524, %v544, -inf
        %546 = vmax.xlane.f32.xlu0 %v545
        %v547 = vpop.xlane.xlu0 %546
        %v548 = vsub.f32 %v544, %v547
        %v549 = vmul.f32 %v548, 1.442695
        %v550 = vpow.pop %v549
        %v551 = vsel %vm524, %v550, 0.0
        %552 = vadd.xlane.f32.xlu0 %v551
        %v553 = vpop.xlane.xlu0 %552
        %v554 = vrcp.pop %v553
        %v555 = vmul.f32 %v550, %v554
        %v556 = vpack.c.bf16 %v555, %v555
        %557 = vrot.lane.b32.xlu0 %v520, 64
        %v558 = vpop.permute.xlu0 %557
        %v560 = vsel %vm524, %v556, 0
        %vm562 = vcmask 1043456
        %v564 = vsel %vm562, %v558, 0
        %566 = vmatpush.bf16.msra.mxu0 0
        %567 = vmatpush.bf16.msra.mxu0 0
        %568 = vmatpush.bf16.msra.mxu0 0
        %569 = vmatpush.bf16.msra.mxu0 0
        %570 = vmatpush.bf16.msra.mxu0 0
        %571 = vmatpush.bf16.msra.mxu0 0
        %572 = vmatpush.bf16.msra.mxu0 0
        %573 = vmatpush.bf16.msra.mxu0 %v564
        %574 = vmatmul.bf16.gmra.mxu0 %v560
        %v575 = vpop.f32.mrf.mxu0
        %v576 = vadd.f32 0.0, %v575
        %v577 = vpop.f32.mrf.mxu0
        %578 = vdwg.mxu0
        %579 = vst.msk [vmem:[#allocation2] sm:$0xff] %vm524, %v576
        %580 = vrot.lane.b32.xlu0 %v520, 120
        %v581 = vpop.permute.xlu0 %580
        %582 = vrot.lane.b32.xlu0 %v520, 88
        %v583 = vpop.permute.xlu0 %582
        %v585 = vsel %vm524, %v581, 0
        %v588 = vsel %vm524, %v583, 0
        %590 = vmatpush.bf16.xpose.msra.mxu0 0
        %591 = vmatpush.bf16.xpose.msra.mxu0 0
        %592 = vmatpush.bf16.xpose.msra.mxu0 0
        %593 = vmatpush.bf16.xpose.msra.mxu0 0
        %594 = vmatpush.bf16.xpose.msra.mxu0 0
        %595 = vmatpush.bf16.xpose.msra.mxu0 0
        %596 = vmatpush.bf16.xpose.msra.mxu0 0
        %597 = vmatpush.bf16.xpose.msra.mxu0 %v588
        %598 = vmatmul.bf16.gmra.mxu0 %v585
        %v599 = vpop.f32.mrf.mxu0
        %v600 = vadd.f32 0.0, %v599
        %v601 = vpop.f32.mrf.mxu0
        %602 = vdwg.mxu0
        %v603 = vsel %vm519, %v600, -1e+09
        %v604 = vsel %vm524, %v603, -inf
        %605 = vmax.xlane.f32.xlu0 %v604
        %v606 = vpop.xlane.xlu0 %605
        %v607 = vsub.f32 %v603, %v606
        %v608 = vmul.f32 %v607, 1.442695
        %v609 = vpow.pop %v608
        %v610 = vsel %vm524, %v609, 0.0
        %611 = vadd.xlane.f32.xlu0 %v610
        %v612 = vpop.xlane.xlu0 %611
        %v613 = vrcp.pop %v612
        %v614 = vmul.f32 %v609, %v613
        %v615 = vpack.c.bf16 %v614, %v614
        %616 = vrot.lane.b32.xlu0 %v520, 56
        %v617 = vpop.permute.xlu0 %616
        %v619 = vsel %vm524, %v615, 0
        %v622 = vsel %vm562, %v617, 0
        %624 = vmatpush.bf16.msra.mxu0 0
        %625 = vmatpush.bf16.msra.mxu0 0
        %626 = vmatpush.bf16.msra.mxu0 0
        %627 = vmatpush.bf16.msra.mxu0 0
        %628 = vmatpush.bf16.msra.mxu0 0
        %629 = vmatpush.bf16.msra.mxu0 0
        %630 = vmatpush.bf16.msra.mxu0 0
        %631 = vmatpush.bf16.msra.mxu0 %v622
        %632 = vmatmul.bf16.gmra.mxu0 %v619
        %v633 = vpop.f32.mrf.mxu0
        %v634 = vadd.f32 0.0, %v633
        %v635 = vpop.f32.mrf.mxu0
        %636 = vdwg.mxu0
        %638 = vrot.lane.b32.xlu0 %v634, 8
        %v639 = vpop.permute.xlu0 %638
        %vm641 = vcmask 130112
        %642 = vst.msk [vmem:[#allocation2] sm:$0xff] %vm641, %v639
        %643 = vrot.lane.b32.xlu0 %v520, 112
        %v644 = vpop.permute.xlu0 %643
        %645 = vrot.lane.b32.xlu0 %v520, 80
        %v646 = vpop.permute.xlu0 %645
        %v648 = vsel %vm524, %v644, 0
        %v651 = vsel %vm524, %v646, 0
        %653 = vmatpush.bf16.xpose.msra.mxu0 0
        %654 = vmatpush.bf16.xpose.msra.mxu0 0
        %655 = vmatpush.bf16.xpose.msra.mxu0 0
        %656 = vmatpush.bf16.xpose.msra.mxu0 0
        %657 = vmatpush.bf16.xpose.msra.mxu0 0
        %658 = vmatpush.bf16.xpose.msra.mxu0 0
        %659 = vmatpush.bf16.xpose.msra.mxu0 0
        %660 = vmatpush.bf16.xpose.msra.mxu0 %v651
        %661 = vmatmul.bf16.gmra.mxu0 %v648
        %v662 = vpop.f32.mrf.mxu0
        %v663 = vadd.f32 0.0, %v662
        %v664 = vpop.f32.mrf.mxu0
        %665 = vdwg.mxu0
        %v666 = vsel %vm519, %v663, -1e+09
        %v667 = vsel %vm524, %v666, -inf
        %668 = vmax.xlane.f32.xlu0 %v667
        %v669 = vpop.xlane.xlu0 %668
        %v670 = vsub.f32 %v666, %v669
        %v671 = vmul.f32 %v670, 1.442695
        %v672 = vpow.pop %v671
        %v673 = vsel %vm524, %v672, 0.0
        %674 = vadd.xlane.f32.xlu0 %v673
        %v675 = vpop.xlane.xlu0 %674
        %v676 = vrcp.pop %v675
        %v677 = vmul.f32 %v672, %v676
        %v678 = vpack.c.bf16 %v677, %v677
        %679 = vrot.lane.b32.xlu0 %v520, 48
        %v680 = vpop.permute.xlu0 %679
        %v682 = vsel %vm524, %v678, 0
        %v685 = vsel %vm562, %v680, 0
        %687 = vmatpush.bf16.msra.mxu0 0
        %688 = vmatpush.bf16.msra.mxu0 0
        %689 = vmatpush.bf16.msra.mxu0 0
        %690 = vmatpush.bf16.msra.mxu0 0
        %691 = vmatpush.bf16.msra.mxu0 0
        %692 = vmatpush.bf16.msra.mxu0 0
        %693 = vmatpush.bf16.msra.mxu0 0
        %694 = vmatpush.bf16.msra.mxu0 %v685
        %695 = vmatmul.bf16.gmra.mxu0 %v682
        %v696 = vpop.f32.mrf.mxu0
        %v697 = vadd.f32 0.0, %v696
        %v698 = vpop.f32.mrf.mxu0
        %699 = vdwg.mxu0
        %701 = vrot.lane.b32.xlu0 %v697, 16
        %v702 = vpop.permute.xlu0 %701
        %vm704 = vcmask 195712
        %705 = vst.msk [vmem:[#allocation2] sm:$0xff] %vm704, %v702
        %706 = vrot.lane.b32.xlu0 %v520, 104
        %v707 = vpop.permute.xlu0 %706
        %708 = vrot.lane.b32.xlu0 %v520, 72
        %v709 = vpop.permute.xlu0 %708
        %v711 = vsel %vm524, %v707, 0
        %v714 = vsel %vm524, %v709, 0
        %716 = vmatpush.bf16.xpose.msra.mxu0 0
        %717 = vmatpush.bf16.xpose.msra.mxu0 0
        %718 = vmatpush.bf16.xpose.msra.mxu0 0
        %719 = vmatpush.bf16.xpose.msra.mxu0 0
        %720 = vmatpush.bf16.xpose.msra.mxu0 0
        %721 = vmatpush.bf16.xpose.msra.mxu0 0
        %722 = vmatpush.bf16.xpose.msra.mxu0 0
        %723 = vmatpush.bf16.xpose.msra.mxu0 %v714
        %724 = vmatmul.bf16.gmra.mxu0 %v711
        %v725 = vpop.f32.mrf.mxu0
        %v726 = vadd.f32 0.0, %v725
        %v727 = vpop.f32.mrf.mxu0
        %728 = vdwg.mxu0
        %v729 = vsel %vm519, %v726, -1e+09
        %v730 = vsel %vm524, %v729, -inf
        %731 = vmax.xlane.f32.xlu0 %v730
        %v732 = vpop.xlane.xlu0 %731
        %v733 = vsub.f32 %v729, %v732
        %v734 = vmul.f32 %v733, 1.442695
        %v735 = vpow.pop %v734
        %v736 = vsel %vm524, %v735, 0.0
        %737 = vadd.xlane.f32.xlu0 %v736
        %v738 = vpop.xlane.xlu0 %737
        %v739 = vrcp.pop %v738
        %v740 = vmul.f32 %v735, %v739
        %v741 = vpack.c.bf16 %v740, %v740
        %742 = vrot.lane.b32.xlu0 %v520, 40
        %v743 = vpop.permute.xlu0 %742
        %v745 = vsel %vm524, %v741, 0
        %v748 = vsel %vm562, %v743, 0
        %750 = vmatpush.bf16.msra.mxu0 0
        %751 = vmatpush.bf16.msra.mxu0 0
        %752 = vmatpush.bf16.msra.mxu0 0
        %753 = vmatpush.bf16.msra.mxu0 0
        %754 = vmatpush.bf16.msra.mxu0 0
        %755 = vmatpush.bf16.msra.mxu0 0
        %756 = vmatpush.bf16.msra.mxu0 0
        %757 = vmatpush.bf16.msra.mxu0 %v748
        %758 = vmatmul.bf16.gmra.mxu0 %v745
        %v759 = vpop.f32.mrf.mxu0
        %v760 = vadd.f32 0.0, %v759
        %v761 = vpop.f32.mrf.mxu0
        %762 = vdwg.mxu0
        %764 = vrot.lane.b32.xlu0 %v760, 24
        %v765 = vpop.permute.xlu0 %764
        %vm767 = vcmask 261312
        %768 = vst.msk [vmem:[#allocation2] sm:$0xff] %vm767, %v765
        %v769 = vld [vmem:[%s6] sm:$0x1]
        %v771 = vperm.slane %v769, 0
        %v773 = vadd.f32 %v437, %v771
        %v774 = vld [vmem:[#allocation2] sm:$0xff]
        %v775 = vpack.c.bf16 %v774, %v774
        %v776 = vld [vmem:[%s5] sm:$0xf]
        %v777 = vld [vmem:[%s5 + $0x4] sm:$0xf]
        %v778 = vld [vmem:[%s5 + $0x8] sm:$0xf]
        %v779 = vld [vmem:[%s5 + $0xc] sm:$0xf]
        %v784 = vunpack.c.l.b16 %v776
        %v785 = vunpack.c.l.b16 %v777
        %v786 = vunpack.c.l.b16 %v778
        %v787 = vunpack.c.l.b16 %v779
        %v788 = vpack.c.b16 %v785, %v784
        %v789 = vpack.c.b16 %v787, %v786
        %v793 = vsel %vm438, %v775, 0
        %795 = vmatpush.bf16.msra.mxu0 0
        %796 = vmatpush.bf16.msra.mxu0 0
        %797 = vmatpush.bf16.msra.mxu0 0
        %798 = vmatpush.bf16.msra.mxu0 0
        %799 = vmatpush.bf16.msra.mxu0 0
        %800 = vmatpush.bf16.msra.mxu0 0
        %801 = vmatpush.bf16.msra.mxu0 %v789
        %802 = vmatpush.bf16.msra.mxu0 %v788
        %803 = vmatmul.bf16.gmra.mxu0 %v793
        %v804 = vpop.f32.mrf.mxu0
        %v805 = vadd.f32 0.0, %v804
        %v806 = vpop.f32.mrf.mxu0
        %807 = vdwg.mxu0
        %v808 = vadd.f32 %v773, %v805
        %v809 = vsel %vm438, %v808, 0.0
        %810 = vadd.xlane.f32.xlu0 %v809
        %v811 = vpop.xlane.xlu0 %810
        %v812 = vmul.f32 %v811, %v448
        %v813 = vsub.f32 %v808, %v812
        %v814 = vmul.f32 %v813, %v813
        %v815 = vsel %vm438, %v814, 0.0
        %816 = vadd.xlane.f32.xlu0 %v815
        %v817 = vpop.xlane.xlu0 %816
        %v818 = vmul.f32 %v817, %v448
        %v819 = vadd.f32 %v818, 1e-05
        %v820 = vrsqrt.pop %v819
        %v821 = vmul.f32 %v820, %v819
        %v822 = vmul.f32 %v821, %v820
        %v823 = vmul.f32 0.5, %v822
        %v824 = vsub.f32 1.5, %v823
        %v825 = vmul.f32 %v820, %v824
        %vm826 = vweird.f32 %v819
        %vm827 = vweird.f32 %v820
        %vm828 = vmor %vm826, %vm827
        %v829 = vsel %vm828, %v820, %v825
        %v830 = vmul.f32 %v813, %v829
        %v831 = vld [vmem:[%s7] sm:$0x1]
        %v833 = vperm.slane %v831, 0
        %v835 = vmul.f32 %v830, %v833
        %v836 = vld [vmem:[%s8] sm:$0x1]
        %v838 = vperm.slane %v836, 0
        %v840 = vadd.f32 %v835, %v838
        %v841 = vpack.c.bf16 %v840, %v840
        %v842 = vld [vmem:[%s9] sm:$0xf]
        %v843 = vld [vmem:[%s9 + $0x4] sm:$0xf]
        %v844 = vld [vmem:[%s9 + $0x8] sm:$0xf]
        %v845 = vld [vmem:[%s9 + $0xc] sm:$0xf]
        %v846 = vld [vmem:[%s10] sm:$0x1]
        %v848 = vperm.slane %v846, 0
        %v854 = vunpack.c.l.b16 %v842
        %v855 = vunpack.c.l.b16 %v843
        %v856 = vunpack.c.l.b16 %v844
        %v857 = vunpack.c.l.b16 %v845
        %v858 = vpack.c.b16 %v855, %v854
        %v859 = vpack.c.b16 %v857, %v856
        %v863 = vsel %vm438, %v841, 0
        %865 = vmatpush.bf16.msra.mxu0 0
        %866 = vmatpush.bf16.msra.mxu0 0
        %867 = vmatpush.bf16.msra.mxu0 0
        %868 = vmatpush.bf16.msra.mxu0 0
        %869 = vmatpush.bf16.msra.mxu0 0
        %870 = vmatpush.bf16.msra.mxu0 0
        %871 = vmatpush.bf16.msra.mxu0 %v859
        %872 = vmatpush.bf16.msra.mxu0 %v858
        %873 = vmatmul.bf16.gmra.mxu0 %v863
        %v874 = vpop.f32.mrf.mxu0
        %v875 = vadd.f32 %v848, %v874
        %v876 = vpop.f32.mrf.mxu0
        %877 = vdwg.mxu0
        %v878 = vmul.f32 %v875, 1.702
        %v879 = vxor.u32 %v878, 2147483648
        %v880 = vmul.f32 %v879, 1.442695
        %v881 = vpow.pop %v880
        %v882 = vadd.f32 %v881, 1.0
        %v883 = vrcp.pop %v882
        %v884 = vmul.f32 %v882, %v883
        %v885 = vsub.f32 1.0, %v884
        %v886 = vmul.f32 %v883, %v885
        %v887 = vadd.f32 %v883, %v886
        %vm888 = vweird.f32 %v882
        %vm889 = vweird.f32 %v883
        %vm890 = vmor %vm888, %vm889
        %v891 = vsel %vm890, %v883, %v887
        %v892 = vand.u32 2147483647, %v882
        %vm893 = vcmp.eq.f32.partialorder %v892, 8.507059e+37
        %v894 = vand.u32 %v882, 2147483648
        %v895 = vor.u32 1.1754944e-38, %v894
        %v896 = vsel %vm893, %v895, %v891
        %v897 = vmul.f32 1.0, %v896
        %v898 = vmul.f32 %v875, %v897
        %v899 = vpack.c.bf16 %v898, %v898
        %v900 = vld [vmem:[%s11] sm:$0xf]
        %v901 = vld [vmem:[%s11 + $0x4] sm:$0xf]
        %v902 = vld [vmem:[%s11 + $0x8] sm:$0xf]
        %v903 = vld [vmem:[%s11 + $0xc] sm:$0xf]
        %v904 = vld [vmem:[%s11 + $0x10] sm:$0xf]
        %v905 = vld [vmem:[%s11 + $0x14] sm:$0xf]
        %v906 = vld [vmem:[%s11 + $0x18] sm:$0xf]
        %v907 = vld [vmem:[%s11 + $0x1c] sm:$0xf]
        %v908 = vld [vmem:[%s11 + $0x20] sm:$0xf]
        %v909 = vld [vmem:[%s11 + $0x24] sm:$0xf]
        %v910 = vld [vmem:[%s11 + $0x28] sm:$0xf]
        %v911 = vld [vmem:[%s11 + $0x2c] sm:$0xf]
        %v912 = vld [vmem:[%s11 + $0x30] sm:$0xf]
        %v913 = vld [vmem:[%s11 + $0x34] sm:$0xf]
        %v914 = vld [vmem:[%s11 + $0x38] sm:$0xf]
        %v915 = vld [vmem:[%s11 + $0x3c] sm:$0xf]
        %v916 = vld [vmem:[%s12] sm:$0x1]
        %v918 = vperm.slane %v916, 0
        %v936 = vunpack.c.l.b16 %v900
        %v937 = vunpack.c.l.b16 %v901
        %v938 = vunpack.c.l.b16 %v902
        %v939 = vunpack.c.l.b16 %v903
        %v940 = vunpack.c.l.b16 %v904
        %v941 = vunpack.c.l.b16 %v905
        %v942 = vunpack.c.l.b16 %v906
        %v943 = vunpack.c.l.b16 %v907
        %v944 = vunpack.c.l.b16 %v908
        %v945 = vunpack.c.l.b16 %v909
        %v946 = vunpack.c.l.b16 %v910
        %v947 = vunpack.c.l.b16 %v911
        %v948 = vunpack.c.l.b16 %v912
        %v949 = vunpack.c.l.b16 %v913
        %v950 = vunpack.c.l.b16 %v914
        %v951 = vunpack.c.l.b16 %v915
        %v952 = vpack.c.b16 %v937, %v936
        %v953 = vpack.c.b16 %v939, %v938
        %v954 = vpack.c.b16 %v941, %v940
        %v955 = vpack.c.b16 %v943, %v942
        %v956 = vpack.c.b16 %v945, %v944
        %v957 = vpack.c.b16 %v947, %v946
        %v958 = vpack.c.b16 %v949, %v948
        %v959 = vpack.c.b16 %v951, %v950
        %968 = vmatpush.bf16.msra.mxu0 %v959
        %969 = vmatpush.bf16.msra.mxu0 %v958
        %970 = vmatpush.bf16.msra.mxu0 %v957
        %971 = vmatpush.bf16.msra.mxu0 %v956
        %972 = vmatpush.bf16.msra.mxu0 %v955
        %973 = vmatpush.bf16.msra.mxu0 %v954
        %974 = vmatpush.bf16.msra.mxu0 %v953
        %975 = vmatpush.bf16.msra.mxu0 %v952
        %976 = vmatmul.bf16.gmra.mxu0 %v899
        %v977 = vpop.f32.mrf.mxu0
        %v978 = vadd.f32 %v918, %v977
        %v979 = vpop.f32.mrf.mxu0
        %980 = vdwg.mxu0
        %v981 = vadd.f32 %v808, %v978
        %982 = vst.msk [vmem:[%s431] sm:$0xff] %vm438, %v981
        %s983 = sand.u32 %s313, 1
        %s984 = scalar_lea.sflag [#allocation4], %s983
        %s985 = sand.u32 %s313, 1
        %s986 = smul.addr %s985, 8
        %s987 = scalar_lea.vmem [#allocation3], %s986
        // Predicated region
        $region73: #{tpu_custom_call.1} parent=71 // pred_check
          %p988 = pneg %p323
        $region74: #{tpu_custom_call.1} parent=71 // pred_check_branch
          %990 = sbr.rel (%p988) target = $region76
        $region75: #{tpu_custom_call.1} parent=71 // pred_region
          %992 = vsyncadd %s984, 0
          %s993 = smul.addr %s27, 8
          %s994 = scalar_lea.hbm %s13, %s993
          %s996 = sshll.u32 %s987, 4
          %s997 = int_to_ptr.vmem [resolvable:$true] %s996
          %s998 = sshll.u32 %s994, 4
          %s999 = int_to_ptr.hbm [resolvable:$true] %s998
          %1001 = dma.vmem_to_hbm [thread:$0]  %s997, 128, %s999, %s984
        $region76: #{tpu_custom_call.1} parent=71 // pred_fallthru
          _
      $region72: #{tpu_custom_call.1} parent=5 // pred_fallthru
        _
      %p1002 = scmp.le.s32.totalorder 2, %s22
      // Predicated region
      $region77: #{tpu_custom_call.1} parent=5 // pred_check
        %p1003 = pneg %p1002
      $region78: #{tpu_custom_call.1} parent=5 // pred_check_branch
        %1005 = sbr.rel (%p1003) target = $region80
      $region79: #{tpu_custom_call.1} parent=5 // pred_region
        %s1006 = ssub.s32 %s22, 2
        // Predicated region
        $region81: #{tpu_custom_call.1} parent=79 // pred_check
          %p1007 = pneg %p329
        $region82: #{tpu_custom_call.1} parent=79 // pred_check_branch
          %1009 = sbr.rel (%p1007) target = $region84
        $region83: #{tpu_custom_call.1} parent=79 // pred_region
          %s1010 = sand.u32 %s314, 1
          %s1011 = scalar_lea.sflag [#allocation4], %s1010
          %s1012 = sand.u32 %s314, 1
          %s1013 = smul.addr %s1012, 8
          %s1014 = scalar_lea.vmem [#allocation3], %s1013
          %1016 = dma.done %s1011, 128
        $region84: #{tpu_custom_call.1} parent=79 // pred_fallthru
          _
      $region80: #{tpu_custom_call.1} parent=5 // pred_fallthru
        _
    $region6: #{tpu_custom_call.1} parent=1 // loop_footer
      %s26 = sadd.s32 1, %s22
    $region7: #{tpu_custom_call.1} parent=1 // loop_footer_branch
      %21 = sbr.rel target = $region3
    $region8: #{tpu_custom_call.1} parent=1 // loop_exit
      _
    %1017 = vsyncpa [#allocation4], 1
    %s1018 = scalar_lea.sflag [#allocation4], 1
    %1019 = vsyncpa %s1018, 1

</llo_original>
